<compile_context>
chip_gen: v7x
topology: tpu7x:2x2x1
jax: 0.10.0
libtpu: 0.0.40
codegen_flags: <defaults>
</compile_context>

<pallas_src>
from functools import partial

import jax
import jax.numpy as jnp
from jax.experimental import pallas as pl
from jax.experimental.pallas import tpu as pltpu

C2, C3, HID = 32, 64, 32      # backbone channel widths / regressor hidden size
FEAT = C2 + C3                # pooled [layer2 | layer3] descriptor width


# ----------------------------------------------------------------------------
# Helpers (host side, trace time).
# ----------------------------------------------------------------------------
def _pointwise_dtype():
    """bf16 VPU math on v6e/v7x; f32 on older chips (no bf16 VALU on <= v5)."""
    try:
        kind = jax.devices()[0].device_kind.lower()
    except Exception:
        return jnp.float32
    for old in ("v2", "v3", "v4", "v5"):
        if old in kind:
            return jnp.float32
    return jnp.bfloat16


def _choose_num_tiles(hw, hw4, target_ds_lanes=2048):
    """Spatial tile count T: bounds per-step VMEM at real ATOM resolutions while
    keeping both the full-res tile (4*target lanes) and the stride-2 tile
    lane-aligned (multiples of 128).  Falls back to T=1 for tiny images."""
    if hw4 < 128 or hw4 % 128 or hw % 128:
        return 1
    t = -(-hw4 // target_ds_lanes)                    # ceil(hw4 / target)
    while t <= hw4 // 128:
        if (hw4 % t == 0 and (hw4 // t) % 128 == 0
                and hw % t == 0 and (hw // t) % 128 == 0):
            return t
        t += 1
    return 1


# ----------------------------------------------------------------------------
# Kernel 1: fused backbone -- grid = (image, spatial_tile).
# ----------------------------------------------------------------------------
def _backbone_kernel(x_ref, xds_ref,
                     w2c_ref, b2c_ref, w2d_ref, b2d_ref,
                     w3_ref, b3_ref,
                     out_ref, acc2_ref, acc3_ref,
                     *, two_branch, cdt, inv_hw, inv_hw4):
    """One spatial tile of one RGB(-D) image.

    x_ref   : (1, 3*nb, TF)  full-res channel planes (lane axis = spatial)
    xds_ref : (1, 3*nb, TD)  stride-2 subsampled planes (TD = TF / 4)
    w2*     : (C2, 3), b2*: (C2, 1)            per-branch layer-2 1x1 conv
    w3_ref  : (nb*C3, nb*C2) bf16 block-diagonal stacked layer-3 weights
    b3_ref  : (nb*C3, 1)
    out_ref : (1, 1, FEAT)   lane-dense pooled [layer2 | layer3] descriptor
    acc2/3  : (8, C2)/(8, C3) f32 pooled-sum accumulators (rows identical)
    """
    t = pl.program_id(1)

    @pl.when(t == 0)
    def _init():
        acc2_ref[...] = jnp.zeros_like(acc2_ref)
        acc3_ref[...] = jnp.zeros_like(acc3_ref)

    def conv3_relu(planes, w2, b2):
        # Cin=3 1x1 conv as 3 unrolled VPU FMAs; spatial stays on the lane axis.
        y = w2[:, 0:1] * planes[0:1, :]
        y = y + w2[:, 1:2] * planes[1:2, :]
        y = y + w2[:, 2:3] * planes[2:3, :]
        return jnp.maximum(y + b2, 0.0)

    def pooled_row_sum(m):
        # Lane-axis sum expressed as ones @ m.T on the (otherwise idle) MXU with
        # f32 accumulation: the result is already a lane-oriented (8, C) block
        # (all rows equal), so the accumulators and the final store stay
        # lane-dense -- no per-tile XLU cross-lane reduce, no transpose.
        ones = jnp.ones((8, m.shape[1]), jnp.bfloat16)
        return jax.lax.dot_general(
            ones, m.astype(jnp.bfloat16), (((1,), (1,)), ((), ())),
            preferred_element_type=jnp.float32)

    w2c = w2c_ref[...].astype(cdt)
    b2c = b2c_ref[...].astype(cdt)

    # ---- layer2 on the full-res tile: pointwise conv + ReLU (+ 'mean' merge).
    l2c = conv3_relu(x_ref[0, 0:3, :].astype(cdt), w2c, b2c)
    if two_branch:
        w2d = w2d_ref[...].astype(cdt)
        b2d = b2d_ref[...].astype(cdt)
        l2d = conv3_relu(x_ref[0, 3:6, :].astype(cdt), w2d, b2d)
        m2 = 0.5 * l2c + 0.5 * l2d
    else:
        m2 = l2c
    acc2_ref[...] += pooled_row_sum(m2)

    # ---- layer3 on the stride-2 tile.  The subsample commutes with the 1x1
    # pointwise conv/ReLU/mean ops, so level-2 is recomputed from the
    # subsampled planes (no full-res intermediate roundtrip).  Both branches
    # share ONE MXU call through the block-diagonal stacked weights. ----
    l2c_ds = conv3_relu(xds_ref[0, 0:3, :].astype(cdt), w2c, b2c)
    if two_branch:
        l2d_ds = conv3_relu(xds_ref[0, 3:6, :].astype(cdt), w2d, b2d)
        lhs = jnp.concatenate([l2c_ds, l2d_ds], axis=0)            # (2*C2, TD)
        y3 = jnp.dot(w3_ref[...], lhs.astype(jnp.bfloat16),
                     preferred_element_type=jnp.float32)           # (2*C3, TD)
        y3 = jnp.maximum(y3 + b3_ref[...], 0.0)
        m3 = 0.5 * (y3[0:C3, :] + y3[C3:2 * C3, :])                # 'mean' merge
    else:
        y3 = jnp.dot(w3_ref[...], l2c_ds.astype(jnp.bfloat16),
                     preferred_element_type=jnp.float32)           # (C3, TD)
        m3 = jnp.maximum(y3 + b3_ref[...], 0.0)
    acc3_ref[...] += pooled_row_sum(m3)

    @pl.when(t == pl.num_programs(1) - 1)
    def _finalize():
        # Lane-dense store of the pooled [layer2 | layer3] descriptor row.
        out_ref[0, :, 0:C2] = acc2_ref[0:1, :] * inv_hw
        out_ref[0, :, C2:FEAT] = acc3_ref[0:1, :] * inv_hw4


def fused_backbone_features(params, im_nchw):
    """(N, 3|6, H, W) images -> pooled [layer2 | layer3] descriptors (N, FEAT)."""
    N, C, H, W = im_nchw.shape
    two_branch = C == 6
    fec = params["fe_color"]
    fed = params["fe_depth"] if two_branch else fec   # RGB-only: single extractor
    cin = C

    hw, hw4 = H * W, (H // 2) * (W // 2)
    # bf16 image planes in the native NCHW layout: spatial is the lane axis
    # (lane-dense, no NCHW->NHWC transpose) and HBM read / input VMEM is halved.
    x = im_nchw.astype(jnp.bfloat16)
    x_full = x.reshape(N, cin, hw)
    # TODO(synk): the stride-2 subsample could be folded into the kernel with a
    # sublane-strided read + lane deinterleave to drop this extra HBM stream;
    # kept as a (bf16) wrapper gather for simplicity.
    x_ds = x[:, :, ::2, ::2].reshape(N, cin, hw4)

    n_tiles = _choose_num_tiles(hw, hw4)
    tf, td = hw // n_tiles, hw4 // n_tiles

    # Stack the two branch layer-3 convs block-diagonally -> one MXU call.
    if two_branch:
        w3 = jnp.zeros((2 * C3, 2 * C2), jnp.float32)
        w3 = w3.at[:C3, :C2].set(fec["w_l3"]).at[C3:, C2:].set(fed["w_l3"])
        b3 = jnp.concatenate([fec["b_l3"], fed["b_l3"]]).reshape(2 * C3, 1)
    else:
        w3 = fec["w_l3"]
        b3 = fec["b_l3"].reshape(C3, 1)
    w3 = w3.astype(jnp.bfloat16)

    kernel = partial(_backbone_kernel, two_branch=two_branch,
                     cdt=_pointwise_dtype(), inv_hw=1.0 / hw, inv_hw4=1.0 / hw4)

    def rep(shape):                 # small weights: same block at every step
        return pl.BlockSpec(shape, lambda i, t: (0,) * len(shape))

    out = pl.pallas_call(
        kernel,
        out_shape=jax.ShapeDtypeStruct((N, 1, FEAT), jnp.float32),
        grid=(N, n_tiles),
        in_specs=[
            pl.BlockSpec((1, cin, tf), lambda i, t: (i, 0, t)),
            pl.BlockSpec((1, cin, td), lambda i, t: (i, 0, t)),
            rep((C2, 3)), rep((C2, 1)), rep((C2, 3)), rep((C2, 1)),
            rep(w3.shape), rep(b3.shape),
        ],
        out_specs=pl.BlockSpec((1, 1, FEAT), lambda i, t: (i, 0, 0)),
        scratch_shapes=[pltpu.VMEM((8, C2), jnp.float32),
                        pltpu.VMEM((8, C3), jnp.float32)],
        compiler_params=pltpu.CompilerParams(
            # Images shard across TensorCores; spatial tiles are a
            # resident-output reduction (scratch accumulators) -> "arbitrary".
            # Per-step VMEM is a few MiB regardless of image size, so no
            # vmem_limit override is needed (fits v7x's 64 MiB comfortably).
            dimension_semantics=("parallel", "arbitrary")),
    )(
        x_full, x_ds,
        fec["w_l2"], fec["b_l2"].reshape(C2, 1),
        fed["w_l2"], fed["b_l2"].reshape(C2, 1),
        w3, b3,
    )
    return out.reshape(N, FEAT)


# ----------------------------------------------------------------------------
# Kernel 2: fused synthetic IoU head (all projections + gating in one launch).
# TODO(synk): the real AtomIoUNet uses PrRoIPool on full feature maps; replaced
# here by global-average-pool modulation with the same call signature.
# ----------------------------------------------------------------------------
def _bbreg_kernel(trpool_ref, tepool_ref, trbb_ref, prop_ref,
                  wmod_ref, bmod_ref, wtest_ref, btest_ref,
                  wbb_ref, bbb_ref, wprop_ref, bprop_ref,
                  out_ref, *, n_train, n_seq, n_rep):
    f32 = jnp.float32
    s = n_seq

    def mean_over_train(v):                                   # (n_train*s, D) -> (s, D)
        acc = v[0:s, :]
        for t in range(1, n_train):
            acc = acc + v[t * s:(t + 1) * s, :]
        return acc * (1.0 / n_train)

    # --- train side: pooled features + bbox encodings, averaged over frames ---
    tr_vec = mean_over_train(trpool_ref[...])                 # (s, FEAT)

    trbb = trbb_ref[...]                                      # (n_train*s, 4)
    bb_enc = bbb_ref[...]                                     # (1, HID)
    for k in range(4):                                        # K=4 contraction -> VPU FMAs
        bb_enc = bb_enc + trbb[:, k:k + 1] * wbb_ref[k:k + 1, :]
    bb_enc = mean_over_train(bb_enc)                          # (s, HID)

    mod = jnp.maximum(
        jnp.dot(tr_vec.astype(jnp.bfloat16), wmod_ref[...].astype(jnp.bfloat16),
                preferred_element_type=f32) + bmod_ref[...], 0.0) + bb_enc     # (s, HID)

    # --- test side projection ---
    tproj = jnp.maximum(
        jnp.dot(tepool_ref[...].astype(jnp.bfloat16), wtest_ref[...].astype(jnp.bfloat16),
                preferred_element_type=f32) + btest_ref[...], 0.0)             # (n_rep*s, HID)

    mod_t = mod if n_rep == 1 else jnp.concatenate([mod] * n_rep, axis=0)
    gate = mod_t * tproj                                      # (n_rep*s, HID)

    # --- proposal encodings: K=4 contraction as VPU FMAs, kept 3-D ---
    prop = prop_ref[...]                                      # (B, P, 4)
    penc = bprop_ref[...]                                     # (1, HID) -> broadcasts
    for k in range(4):
        penc = penc + prop[:, :, k:k + 1] * wprop_ref[k:k + 1, :]              # (B, P, HID)

    # --- IoU gating reduction.  (B, P, HID) = (2, 8, 32) here, so the VPU
    # broadcast + lane reduction is noise; for ATOM-scale proposal counts
    # switch this to an MXU einsum ('bqh,bph->bqp'). ---
    out_ref[...] = jnp.sum(gate[:, None, :] * penc, axis=-1)


def fused_bb_regressor(rp, train_pool, test_pool, train_bb, test_proposals):
    n_train, n_seq = train_bb.shape[0], train_bb.shape[1]
    n_prop = test_proposals.shape[2]
    n_rep = test_pool.shape[0] // n_seq

    prop = test_proposals.reshape(n_train * n_seq, n_prop, 4)
    if prop.shape[0] != test_pool.shape[0]:
        # Replicate proposal encodings across test frames.
        prop = jnp.tile(prop, (test_pool.shape[0] // prop.shape[0], 1, 1))

    def full(shape):
        return pl.BlockSpec(shape, lambda i: (0,) * len(shape))

    kernel = partial(_bbreg_kernel, n_train=n_train, n_seq=n_seq, n_rep=n_rep)
    return pl.pallas_call(
        kernel,
        out_shape=jax.ShapeDtypeStruct((test_pool.shape[0], n_prop), jnp.float32),
        grid=(1,),
        in_specs=[
            full(train_pool.shape), full(test_pool.shape),
            full((n_train * n_seq, 4)), full(prop.shape),
            full(rp["w_mod"].shape), full((1, HID)),
            full(rp["w_test"].shape), full((1, HID)),
            full(rp["w_bb"].shape), full((1, HID)),
            full(rp["w_prop"].shape), full((1, HID)),
        ],
        out_specs=full((test_pool.shape[0], n_prop)),
    )(
        train_pool, test_pool, train_bb.reshape(n_train * n_seq, 4), prop,
        rp["w_mod"], rp["b_mod"].reshape(1, HID),
        rp["w_test"], rp["b_test"].reshape(1, HID),
        rp["w_bb"], rp["b_bb"].reshape(1, HID),
        rp["w_prop"], rp["b_prop"].reshape(1, HID),
    )


# ----------------------------------------------------------------------------
# ATOMnet_DeT.forward
# ----------------------------------------------------------------------------
def atomnet_det_forward(params, train_imgs, test_imgs, train_bb, test_proposals):
    num_sequences = train_imgs.shape[-4]
    num_train_images = train_imgs.shape[0] if train_imgs.ndim == 5 else 1

    train_flat = train_imgs.reshape(-1, *train_imgs.shape[-3:])
    test_flat = test_imgs.reshape(-1, *test_imgs.shape[-3:])
    n_train_rows = train_flat.shape[0]

    # Single fused backbone launch for all train + test images.
    feats = fused_backbone_features(
        params, jnp.concatenate([train_flat, test_flat], axis=0))
    train_pool, test_pool = feats[:n_train_rows], feats[n_train_rows:]

    iou_pred = fused_bb_regressor(
        params["bbreg"], train_pool, test_pool,
        train_bb.reshape(num_train_images, num_sequences, 4),
        test_proposals.reshape(num_train_images, num_sequences, -1, 4),
    )
    return iou_pred


# ----------------------------------------------------------------------------
# Deterministic synthetic parameters (weights stored in (Cout, Cin) plane layout)
# ----------------------------------------------------------------------------
def init_params():
    ks = jax.random.split(jax.random.PRNGKey(42), 12)

    def fe(k1, k2, k3, k4):
        return {
            "w_l2": 0.1 * jax.random.normal(k1, (C2, 3), jnp.float32),
            "b_l2": 0.01 * jax.random.normal(k2, (C2,), jnp.float32),
            "w_l3": 0.1 * jax.random.normal(k3, (C3, C2), jnp.float32),
            "b_l3": 0.01 * jax.random.normal(k4, (C3,), jnp.float32),
        }

    return {
        "fe_color": fe(ks[0], ks[1], ks[2], ks[3]),
        "fe_depth": fe(ks[4], ks[5], ks[6], ks[7]),
        "bbreg": {
            "w_mod": 0.1 * jax.random.normal(ks[8], (FEAT, HID), jnp.float32),
            "b_mod": jnp.zeros((HID,), jnp.float32),
            "w_test": 0.1 * jax.random.normal(ks[9], (FEAT, HID), jnp.float32),
            "b_test": jnp.zeros((HID,), jnp.float32),
            "w_bb": 0.1 * jax.random.normal(ks[10], (4, HID), jnp.float32),
            "b_bb": jnp.zeros((HID,), jnp.float32),
            "w_prop": 0.1 * jax.random.normal(ks[11], (4, HID), jnp.float32),
            "b_prop": jnp.zeros((HID,), jnp.float32),
        },
    }


if __name__ == "__main__":
    key = jax.random.PRNGKey(0)
    k1, k2, k3, k4 = jax.random.split(key, 4)

    # [num_train_images, num_sequences, 6 (RGB+D), H, W]
    T_train, T_test, S, P = 1, 1, 2, 8
    train_imgs = jax.random.normal(k1, (T_train, S, 6, 16, 16), jnp.float32)
    test_imgs = jax.random.normal(k2, (T_test, S, 6, 16, 16), jnp.float32)
    train_bb = jax.random.uniform(k3, (T_train, S, 4), jnp.float32)
    test_proposals = jax.random.uniform(k4, (T_train, S, P, 4), jnp.float32)

    params = init_params()
    iou_pred = jax.jit(atomnet_det_forward)(
        params, train_imgs, test_imgs, train_bb, test_proposals)
    jax.block_until_ready(iou_pred)

    assert iou_pred.shape == (T_test * S, P), iou_pred.shape
    assert bool(jnp.all(jnp.isfinite(iou_pred)))
    print("KERNEL_OK")
</pallas_src>

<mosaic_0001>
module attributes {stable_mosaic.version = 11 : i64} {
  func.func @_backbone_kernel(%arg0: i32, %arg1: i32, %arg2: memref<1x6x256xbf16, #tpu.memory_space<vmem>>, %arg3: memref<1x6x64xbf16, #tpu.memory_space<vmem>>, %arg4: memref<32x3xf32, #tpu.memory_space<vmem>>, %arg5: memref<32x1xf32, #tpu.memory_space<vmem>>, %arg6: memref<32x3xf32, #tpu.memory_space<vmem>>, %arg7: memref<32x1xf32, #tpu.memory_space<vmem>>, %arg8: memref<128x64xbf16, #tpu.memory_space<vmem>>, %arg9: memref<128x1xf32, #tpu.memory_space<vmem>>, %arg10: memref<1x1x96xf32, #tpu.memory_space<vmem>>, %arg11: memref<8x32xf32, #tpu.memory_space<vmem>>, %arg12: memref<8x64xf32, #tpu.memory_space<vmem>>) attributes {dimension_semantics = [#tpu.dimension_semantics<parallel>, #tpu.dimension_semantics<arbitrary>], iteration_bounds = array<i64: 4, 1>, scalar_prefetch = 0 : i64, scratch_operands = 2 : i64, tpu.core_type = #tpu.core_type<tc>, window_params = [{transform_indices = @transform_0, window_bounds = array<i64: 1, 6, 256>}, {transform_indices = @transform_1, window_bounds = array<i64: 1, 6, 64>}, {pipeline_mode = #tpu.pipeline_mode<synchronous>, transform_indices = @transform_2, window_bounds = array<i64: 32, 3>}, {pipeline_mode = #tpu.pipeline_mode<synchronous>, transform_indices = @transform_3, window_bounds = array<i64: 32, 1>}, {pipeline_mode = #tpu.pipeline_mode<synchronous>, transform_indices = @transform_4, window_bounds = array<i64: 32, 3>}, {pipeline_mode = #tpu.pipeline_mode<synchronous>, transform_indices = @transform_5, window_bounds = array<i64: 32, 1>}, {pipeline_mode = #tpu.pipeline_mode<synchronous>, transform_indices = @transform_6, window_bounds = array<i64: 128, 64>}, {pipeline_mode = #tpu.pipeline_mode<synchronous>, transform_indices = @transform_7, window_bounds = array<i64: 128, 1>}, {transform_indices = @transform_8, window_bounds = array<i64: 1, 1, 96>}]} {
    %c0_i32 = arith.constant 0 : i32
    %0 = arith.cmpi eq, %arg1, %c0_i32 : i32
    %1 = arith.extui %0 : i1 to i32
    %c0_i32_0 = arith.constant 0 : i32
    %2 = arith.cmpi ne, %1, %c0_i32_0 : i32
    scf.if %2 {
      %cst_45 = arith.constant 0.000000e+00 : f32
      %135 = vector.broadcast %cst_45 : f32 to vector<8x32xf32>
      %c0_46 = arith.constant 0 : index
      %c0_47 = arith.constant 0 : index
      %136 = vector.load %arg11[%c0_46, %c0_47] : memref<8x32xf32, #tpu.memory_space<vmem>>, vector<8x32xf32>
      tpu.vector_store %arg11[%c0_46, %c0_47], %135 {strides = array<i32>} : memref<8x32xf32, #tpu.memory_space<vmem>>, vector<8x32xf32>,
      %cst_48 = arith.constant 0.000000e+00 : f32
      %137 = vector.broadcast %cst_48 : f32 to vector<8x64xf32>
      %c0_49 = arith.constant 0 : index
      %c0_50 = arith.constant 0 : index
      %138 = vector.load %arg12[%c0_49, %c0_50] : memref<8x64xf32, #tpu.memory_space<vmem>>, vector<8x64xf32>
      tpu.vector_store %arg12[%c0_49, %c0_50], %137 {strides = array<i32>} : memref<8x64xf32, #tpu.memory_space<vmem>>, vector<8x64xf32>,
    } else {
    }
    %c0 = arith.constant 0 : index
    %c0_1 = arith.constant 0 : index
    %3 = vector.load %arg4[%c0, %c0_1] : memref<32x3xf32, #tpu.memory_space<vmem>>, vector<32x3xf32>
    %4 = arith.truncf %3 : vector<32x3xf32> to vector<32x3xbf16>
    %c0_2 = arith.constant 0 : index
    %c0_3 = arith.constant 0 : index
    %5 = vector.load %arg5[%c0_2, %c0_3] : memref<32x1xf32, #tpu.memory_space<vmem>>, vector<32x1xf32>
    %6 = arith.truncf %5 : vector<32x1xf32> to vector<32x1xbf16>
    %c0_4 = arith.constant 0 : index
    %c0_5 = arith.constant 0 : index
    %c0_6 = arith.constant 0 : index
    %7 = vector.load %arg2[%c0_4, %c0_5, %c0_6] : memref<1x6x256xbf16, #tpu.memory_space<vmem>>, vector<1x3x256xbf16>
    %8 = vector.shape_cast %7 : vector<1x3x256xbf16> to vector<3x256xbf16>
    %9 = vector.extract_strided_slice %4 {offsets = [0, 0], sizes = [32, 1], strides = [1, 1]} : vector<32x3xbf16> to vector<32x1xbf16>
    %10 = vector.extract_strided_slice %8 {offsets = [0, 0], sizes = [1, 256], strides = [1, 1]} : vector<3x256xbf16> to vector<1x256xbf16>
    %11 = vector.broadcast %9 : vector<32x1xbf16> to vector<32x256xbf16>
    %12 = vector.broadcast %10 : vector<1x256xbf16> to vector<32x256xbf16>
    %13 = arith.mulf %11, %12 : vector<32x256xbf16>
    %14 = vector.extract_strided_slice %4 {offsets = [0, 1], sizes = [32, 1], strides = [1, 1]} : vector<32x3xbf16> to vector<32x1xbf16>
    %15 = vector.extract_strided_slice %8 {offsets = [1, 0], sizes = [1, 256], strides = [1, 1]} : vector<3x256xbf16> to vector<1x256xbf16>
    %16 = vector.broadcast %14 : vector<32x1xbf16> to vector<32x256xbf16>
    %17 = vector.broadcast %15 : vector<1x256xbf16> to vector<32x256xbf16>
    %18 = arith.mulf %16, %17 : vector<32x256xbf16>
    %19 = arith.addf %13, %18 : vector<32x256xbf16>
    %20 = vector.extract_strided_slice %4 {offsets = [0, 2], sizes = [32, 1], strides = [1, 1]} : vector<32x3xbf16> to vector<32x1xbf16>
    %21 = vector.extract_strided_slice %8 {offsets = [2, 0], sizes = [1, 256], strides = [1, 1]} : vector<3x256xbf16> to vector<1x256xbf16>
    %22 = vector.broadcast %20 : vector<32x1xbf16> to vector<32x256xbf16>
    %23 = vector.broadcast %21 : vector<1x256xbf16> to vector<32x256xbf16>
    %24 = arith.mulf %22, %23 : vector<32x256xbf16>
    %25 = arith.addf %19, %24 : vector<32x256xbf16>
    %26 = vector.broadcast %6 : vector<32x1xbf16> to vector<32x256xbf16>
    %27 = arith.addf %25, %26 : vector<32x256xbf16>
    %cst = arith.constant 0.000000e+00 : bf16
    %28 = vector.broadcast %cst : bf16 to vector<32x256xbf16>
    %29 = arith.maximumf %27, %28 : vector<32x256xbf16>
    %c0_7 = arith.constant 0 : index
    %c0_8 = arith.constant 0 : index
    %30 = vector.load %arg6[%c0_7, %c0_8] : memref<32x3xf32, #tpu.memory_space<vmem>>, vector<32x3xf32>
    %31 = arith.truncf %30 : vector<32x3xf32> to vector<32x3xbf16>
    %c0_9 = arith.constant 0 : index
    %c0_10 = arith.constant 0 : index
    %32 = vector.load %arg7[%c0_9, %c0_10] : memref<32x1xf32, #tpu.memory_space<vmem>>, vector<32x1xf32>
    %33 = arith.truncf %32 : vector<32x1xf32> to vector<32x1xbf16>
    %c0_11 = arith.constant 0 : index
    %c3 = arith.constant 3 : index
    %c0_12 = arith.constant 0 : index
    %34 = vector.load %arg2[%c0_11, %c3, %c0_12] : memref<1x6x256xbf16, #tpu.memory_space<vmem>>, vector<1x3x256xbf16>
    %35 = vector.shape_cast %34 : vector<1x3x256xbf16> to vector<3x256xbf16>
    %36 = vector.extract_strided_slice %31 {offsets = [0, 0], sizes = [32, 1], strides = [1, 1]} : vector<32x3xbf16> to vector<32x1xbf16>
    %37 = vector.extract_strided_slice %35 {offsets = [0, 0], sizes = [1, 256], strides = [1, 1]} : vector<3x256xbf16> to vector<1x256xbf16>
    %38 = vector.broadcast %36 : vector<32x1xbf16> to vector<32x256xbf16>
    %39 = vector.broadcast %37 : vector<1x256xbf16> to vector<32x256xbf16>
    %40 = arith.mulf %38, %39 : vector<32x256xbf16>
    %41 = vector.extract_strided_slice %31 {offsets = [0, 1], sizes = [32, 1], strides = [1, 1]} : vector<32x3xbf16> to vector<32x1xbf16>
    %42 = vector.extract_strided_slice %35 {offsets = [1, 0], sizes = [1, 256], strides = [1, 1]} : vector<3x256xbf16> to vector<1x256xbf16>
    %43 = vector.broadcast %41 : vector<32x1xbf16> to vector<32x256xbf16>
    %44 = vector.broadcast %42 : vector<1x256xbf16> to vector<32x256xbf16>
    %45 = arith.mulf %43, %44 : vector<32x256xbf16>
    %46 = arith.addf %40, %45 : vector<32x256xbf16>
    %47 = vector.extract_strided_slice %31 {offsets = [0, 2], sizes = [32, 1], strides = [1, 1]} : vector<32x3xbf16> to vector<32x1xbf16>
    %48 = vector.extract_strided_slice %35 {offsets = [2, 0], sizes = [1, 256], strides = [1, 1]} : vector<3x256xbf16> to vector<1x256xbf16>
    %49 = vector.broadcast %47 : vector<32x1xbf16> to vector<32x256xbf16>
    %50 = vector.broadcast %48 : vector<1x256xbf16> to vector<32x256xbf16>
    %51 = arith.mulf %49, %50 : vector<32x256xbf16>
    %52 = arith.addf %46, %51 : vector<32x256xbf16>
    %53 = vector.broadcast %33 : vector<32x1xbf16> to vector<32x256xbf16>
    %54 = arith.addf %52, %53 : vector<32x256xbf16>
    %cst_13 = arith.constant 0.000000e+00 : bf16
    %55 = vector.broadcast %cst_13 : bf16 to vector<32x256xbf16>
    %56 = arith.maximumf %54, %55 : vector<32x256xbf16>
    %cst_14 = arith.constant 5.000000e-01 : bf16
    %57 = vector.broadcast %cst_14 : bf16 to vector<32x256xbf16>
    %58 = arith.mulf %57, %29 : vector<32x256xbf16>
    %cst_15 = arith.constant 5.000000e-01 : bf16
    %59 = vector.broadcast %cst_15 : bf16 to vector<32x256xbf16>
    %60 = arith.mulf %59, %56 : vector<32x256xbf16>
    %61 = arith.addf %58, %60 : vector<32x256xbf16>
    %c0_16 = arith.constant 0 : index
    %c0_17 = arith.constant 0 : index
    %62 = vector.load %arg11[%c0_16, %c0_17] : memref<8x32xf32, #tpu.memory_space<vmem>>, vector<8x32xf32>
    %cst_18 = arith.constant 1.000000e+00 : bf16
    %63 = vector.broadcast %cst_18 : bf16 to vector<8x256xbf16>
    %cst_19 = arith.constant dense<0.000000e+00> : vector<8x32xf32>
    %64 = tpu.matmul %63, %61, %cst_19 {dimension_numbers = #tpu.dot_dimension_numbers<[1], [1], [0], [0], [0, 0, 1, 0], [], []>} : vector<8x256xbf16>, vector<32x256xbf16>, vector<8x32xf32> -> vector<8x32xf32>
    %65 = arith.addf %62, %64 : vector<8x32xf32>
    %c0_20 = arith.constant 0 : index
    %c0_21 = arith.constant 0 : index
    %66 = vector.load %arg11[%c0_20, %c0_21] : memref<8x32xf32, #tpu.memory_space<vmem>>, vector<8x32xf32>
    tpu.vector_store %arg11[%c0_20, %c0_21], %65 {strides = array<i32>} : memref<8x32xf32, #tpu.memory_space<vmem>>, vector<8x32xf32>,
    %c0_22 = arith.constant 0 : index
    %c0_23 = arith.constant 0 : index
    %c0_24 = arith.constant 0 : index
    %67 = vector.load %arg3[%c0_22, %c0_23, %c0_24] : memref<1x6x64xbf16, #tpu.memory_space<vmem>>, vector<1x3x64xbf16>
    %68 = vector.shape_cast %67 : vector<1x3x64xbf16> to vector<3x64xbf16>
    %69 = vector.extract_strided_slice %4 {offsets = [0, 0], sizes = [32, 1], strides = [1, 1]} : vector<32x3xbf16> to vector<32x1xbf16>
    %70 = vector.extract_strided_slice %68 {offsets = [0, 0], sizes = [1, 64], strides = [1, 1]} : vector<3x64xbf16> to vector<1x64xbf16>
    %71 = vector.broadcast %69 : vector<32x1xbf16> to vector<32x64xbf16>
    %72 = vector.broadcast %70 : vector<1x64xbf16> to vector<32x64xbf16>
    %73 = arith.mulf %71, %72 : vector<32x64xbf16>
    %74 = vector.extract_strided_slice %4 {offsets = [0, 1], sizes = [32, 1], strides = [1, 1]} : vector<32x3xbf16> to vector<32x1xbf16>
    %75 = vector.extract_strided_slice %68 {offsets = [1, 0], sizes = [1, 64], strides = [1, 1]} : vector<3x64xbf16> to vector<1x64xbf16>
    %76 = vector.broadcast %74 : vector<32x1xbf16> to vector<32x64xbf16>
    %77 = vector.broadcast %75 : vector<1x64xbf16> to vector<32x64xbf16>
    %78 = arith.mulf %76, %77 : vector<32x64xbf16>
    %79 = arith.addf %73, %78 : vector<32x64xbf16>
    %80 = vector.extract_strided_slice %4 {offsets = [0, 2], sizes = [32, 1], strides = [1, 1]} : vector<32x3xbf16> to vector<32x1xbf16>
    %81 = vector.extract_strided_slice %68 {offsets = [2, 0], sizes = [1, 64], strides = [1, 1]} : vector<3x64xbf16> to vector<1x64xbf16>
    %82 = vector.broadcast %80 : vector<32x1xbf16> to vector<32x64xbf16>
    %83 = vector.broadcast %81 : vector<1x64xbf16> to vector<32x64xbf16>
    %84 = arith.mulf %82, %83 : vector<32x64xbf16>
    %85 = arith.addf %79, %84 : vector<32x64xbf16>
    %86 = vector.broadcast %6 : vector<32x1xbf16> to vector<32x64xbf16>
    %87 = arith.addf %85, %86 : vector<32x64xbf16>
    %cst_25 = arith.constant 0.000000e+00 : bf16
    %88 = vector.broadcast %cst_25 : bf16 to vector<32x64xbf16>
    %89 = arith.maximumf %87, %88 : vector<32x64xbf16>
    %c0_26 = arith.constant 0 : index
    %c3_27 = arith.constant 3 : index
    %c0_28 = arith.constant 0 : index
    %90 = vector.load %arg3[%c0_26, %c3_27, %c0_28] : memref<1x6x64xbf16, #tpu.memory_space<vmem>>, vector<1x3x64xbf16>
    %91 = vector.shape_cast %90 : vector<1x3x64xbf16> to vector<3x64xbf16>
    %92 = vector.extract_strided_slice %31 {offsets = [0, 0], sizes = [32, 1], strides = [1, 1]} : vector<32x3xbf16> to vector<32x1xbf16>
    %93 = vector.extract_strided_slice %91 {offsets = [0, 0], sizes = [1, 64], strides = [1, 1]} : vector<3x64xbf16> to vector<1x64xbf16>
    %94 = vector.broadcast %92 : vector<32x1xbf16> to vector<32x64xbf16>
    %95 = vector.broadcast %93 : vector<1x64xbf16> to vector<32x64xbf16>
    %96 = arith.mulf %94, %95 : vector<32x64xbf16>
    %97 = vector.extract_strided_slice %31 {offsets = [0, 1], sizes = [32, 1], strides = [1, 1]} : vector<32x3xbf16> to vector<32x1xbf16>
    %98 = vector.extract_strided_slice %91 {offsets = [1, 0], sizes = [1, 64], strides = [1, 1]} : vector<3x64xbf16> to vector<1x64xbf16>
    %99 = vector.broadcast %97 : vector<32x1xbf16> to vector<32x64xbf16>
    %100 = vector.broadcast %98 : vector<1x64xbf16> to vector<32x64xbf16>
    %101 = arith.mulf %99, %100 : vector<32x64xbf16>
    %102 = arith.addf %96, %101 : vector<32x64xbf16>
    %103 = vector.extract_strided_slice %31 {offsets = [0, 2], sizes = [32, 1], strides = [1, 1]} : vector<32x3xbf16> to vector<32x1xbf16>
    %104 = vector.extract_strided_slice %91 {offsets = [2, 0], sizes = [1, 64], strides = [1, 1]} : vector<3x64xbf16> to vector<1x64xbf16>
    %105 = vector.broadcast %103 : vector<32x1xbf16> to vector<32x64xbf16>
    %106 = vector.broadcast %104 : vector<1x64xbf16> to vector<32x64xbf16>
    %107 = arith.mulf %105, %106 : vector<32x64xbf16>
    %108 = arith.addf %102, %107 : vector<32x64xbf16>
    %109 = vector.broadcast %33 : vector<32x1xbf16> to vector<32x64xbf16>
    %110 = arith.addf %108, %109 : vector<32x64xbf16>
    %cst_29 = arith.constant 0.000000e+00 : bf16
    %111 = vector.broadcast %cst_29 : bf16 to vector<32x64xbf16>
    %112 = arith.maximumf %110, %111 : vector<32x64xbf16>
    %113 = tpu.concatenate %89, %112 in 0 : vector<32x64xbf16>, vector<32x64xbf16> -> vector<64x64xbf16>
    %c0_30 = arith.constant 0 : index
    %c0_31 = arith.constant 0 : index
    %114 = vector.load %arg8[%c0_30, %c0_31] : memref<128x64xbf16, #tpu.memory_space<vmem>>, vector<128x64xbf16>
    %cst_32 = arith.constant dense<0.000000e+00> : vector<128x64xf32>
    %115 = tpu.matmul %114, %113, %cst_32 {dimension_numbers = #tpu.dot_dimension_numbers<[1], [0], [0], [1], [0, 0, 1, 1], [], []>} : vector<128x64xbf16>, vector<64x64xbf16>, vector<128x64xf32> -> vector<128x64xf32>
    %c0_33 = arith.constant 0 : index
    %c0_34 = arith.constant 0 : index
    %116 = vector.load %arg9[%c0_33, %c0_34] : memref<128x1xf32, #tpu.memory_space<vmem>>, vector<128x1xf32>
    %117 = vector.broadcast %116 : vector<128x1xf32> to vector<128x64xf32>
    %118 = arith.addf %115, %117 : vector<128x64xf32>
    %cst_35 = arith.constant 0.000000e+00 : f32
    %119 = vector.broadcast %cst_35 : f32 to vector<128x64xf32>
    %120 = arith.maximumf %118, %119 : vector<128x64xf32>
    %121 = vector.extract_strided_slice %120 {offsets = [0, 0], sizes = [64, 64], strides = [1, 1]} : vector<128x64xf32> to vector<64x64xf32>
    %122 = vector.extract_strided_slice %120 {offsets = [64, 0], sizes = [64, 64], strides = [1, 1]} : vector<128x64xf32> to vector<64x64xf32>
    %123 = arith.addf %121, %122 : vector<64x64xf32>
    %cst_36 = arith.constant 5.000000e-01 : f32
    %124 = vector.broadcast %cst_36 : f32 to vector<64x64xf32>
    %125 = arith.mulf %124, %123 : vector<64x64xf32>
    %c0_37 = arith.constant 0 : index
    %c0_38 = arith.constant 0 : index
    %126 = vector.load %arg12[%c0_37, %c0_38] : memref<8x64xf32, #tpu.memory_space<vmem>>, vector<8x64xf32>
    %cst_39 = arith.constant 1.000000e+00 : bf16
    %127 = vector.broadcast %cst_39 : bf16 to vector<8x64xbf16>
    %128 = arith.truncf %125 : vector<64x64xf32> to vector<64x64xbf16>
    %cst_40 = arith.constant dense<0.000000e+00> : vector<8x64xf32>
    %129 = tpu.matmul %127, %128, %cst_40 {dimension_numbers = #tpu.dot_dimension_numbers<[1], [1], [0], [0], [0, 0, 1, 0], [], []>} : vector<8x64xbf16>, vector<64x64xbf16>, vector<8x64xf32> -> vector<8x64xf32>
    %130 = arith.addf %126, %129 : vector<8x64xf32>
    %c0_41 = arith.constant 0 : index
    %c0_42 = arith.constant 0 : index
    %131 = vector.load %arg12[%c0_41, %c0_42] : memref<8x64xf32, #tpu.memory_space<vmem>>, vector<8x64xf32>
    tpu.vector_store %arg12[%c0_41, %c0_42], %130 {strides = array<i32>} : memref<8x64xf32, #tpu.memory_space<vmem>>, vector<8x64xf32>,
    %c0_i32_43 = arith.constant 0 : i32
    %132 = arith.cmpi eq, %arg1, %c0_i32_43 : i32
    %133 = arith.extui %132 : i1 to i32
    %c0_i32_44 = arith.constant 0 : i32
    %134 = arith.cmpi ne, %133, %c0_i32_44 : i32
    scf.if %134 {
      %c0_45 = arith.constant 0 : index
      %c0_46 = arith.constant 0 : index
      %135 = vector.load %arg11[%c0_45, %c0_46] : memref<8x32xf32, #tpu.memory_space<vmem>>, vector<1x32xf32>
      %cst_47 = arith.constant 3.906250e-03 : f32
      %136 = vector.broadcast %cst_47 : f32 to vector<1x32xf32>
      %137 = arith.mulf %135, %136 : vector<1x32xf32>
      %c0_48 = arith.constant 0 : index
      %c0_49 = arith.constant 0 : index
      %c0_50 = arith.constant 0 : index
      %138 = vector.load %arg10[%c0_48, %c0_49, %c0_50] : memref<1x1x96xf32, #tpu.memory_space<vmem>>, vector<1x1x32xf32>
      %139 = vector.shape_cast %138 : vector<1x1x32xf32> to vector<1x32xf32>
      %140 = vector.shape_cast %137 : vector<1x32xf32> to vector<1x1x32xf32>
      tpu.vector_store %arg10[%c0_48, %c0_49, %c0_50], %140 {strides = array<i32>} : memref<1x1x96xf32, #tpu.memory_space<vmem>>, vector<1x1x32xf32>,
      %c0_51 = arith.constant 0 : index
      %c0_52 = arith.constant 0 : index
      %141 = vector.load %arg12[%c0_51, %c0_52] : memref<8x64xf32, #tpu.memory_space<vmem>>, vector<1x64xf32>
      %cst_53 = arith.constant 1.562500e-02 : f32
      %142 = vector.broadcast %cst_53 : f32 to vector<1x64xf32>
      %143 = arith.mulf %141, %142 : vector<1x64xf32>
      %c0_54 = arith.constant 0 : index
      %c0_55 = arith.constant 0 : index
      %c32 = arith.constant 32 : index
      %144 = vector.load %arg10[%c0_54, %c0_55, %c32] : memref<1x1x96xf32, #tpu.memory_space<vmem>>, vector<1x1x64xf32>
      %145 = vector.shape_cast %144 : vector<1x1x64xf32> to vector<1x64xf32>
      %146 = vector.shape_cast %143 : vector<1x64xf32> to vector<1x1x64xf32>
      tpu.vector_store %arg10[%c0_54, %c0_55, %c32], %146 {strides = array<i32>} : memref<1x1x96xf32, #tpu.memory_space<vmem>>, vector<1x1x64xf32>,
    } else {
    }
    return
  }
  func.func @transform_0(%arg0: i32, %arg1: i32) -> (i32, i32, i32) {
    %c0_i32 = arith.constant 0 : i32
    %c0_i32_0 = arith.constant 0 : i32
    return %arg0, %c0_i32, %arg1 : i32, i32, i32
  }
  func.func @transform_1(%arg0: i32, %arg1: i32) -> (i32, i32, i32) {
    %c0_i32 = arith.constant 0 : i32
    %c0_i32_0 = arith.constant 0 : i32
    return %arg0, %c0_i32, %arg1 : i32, i32, i32
  }
  func.func @transform_2(%arg0: i32, %arg1: i32) -> (i32, i32) {
    %c0_i32 = arith.constant 0 : i32
    %c0_i32_0 = arith.constant 0 : i32
    %c0_i32_1 = arith.constant 0 : i32
    return %c0_i32, %c0_i32_0 : i32, i32
  }
  func.func @transform_3(%arg0: i32, %arg1: i32) -> (i32, i32) {
    %c0_i32 = arith.constant 0 : i32
    %c0_i32_0 = arith.constant 0 : i32
    %c0_i32_1 = arith.constant 0 : i32
    return %c0_i32, %c0_i32_0 : i32, i32
  }
  func.func @transform_4(%arg0: i32, %arg1: i32) -> (i32, i32) {
    %c0_i32 = arith.constant 0 : i32
    %c0_i32_0 = arith.constant 0 : i32
    %c0_i32_1 = arith.constant 0 : i32
    return %c0_i32, %c0_i32_0 : i32, i32
  }
  func.func @transform_5(%arg0: i32, %arg1: i32) -> (i32, i32) {
    %c0_i32 = arith.constant 0 : i32
    %c0_i32_0 = arith.constant 0 : i32
    %c0_i32_1 = arith.constant 0 : i32
    return %c0_i32, %c0_i32_0 : i32, i32
  }
  func.func @transform_6(%arg0: i32, %arg1: i32) -> (i32, i32) {
    %c0_i32 = arith.constant 0 : i32
    %c0_i32_0 = arith.constant 0 : i32
    %c0_i32_1 = arith.constant 0 : i32
    return %c0_i32, %c0_i32_0 : i32, i32
  }
  func.func @transform_7(%arg0: i32, %arg1: i32) -> (i32, i32) {
    %c0_i32 = arith.constant 0 : i32
    %c0_i32_0 = arith.constant 0 : i32
    %c0_i32_1 = arith.constant 0 : i32
    return %c0_i32, %c0_i32_0 : i32, i32
  }
  func.func @transform_8(%arg0: i32, %arg1: i32) -> (i32, i32, i32) {
    %c0_i32 = arith.constant 0 : i32
    %c0_i32_0 = arith.constant 0 : i32
    %c0_i32_1 = arith.constant 0 : i32
    return %arg0, %c0_i32, %c0_i32_0 : i32, i32, i32
  }
}

module attributes {stable_mosaic.version = 11 : i64} {
  func.func @_bbreg_kernel(%arg0: i32, %arg1: memref<2x96xf32, #tpu.memory_space<vmem>>, %arg2: memref<2x96xf32, #tpu.memory_space<vmem>>, %arg3: memref<2x4xf32, #tpu.memory_space<vmem>>, %arg4: memref<2x8x4xf32, #tpu.memory_space<vmem>>, %arg5: memref<96x32xf32, #tpu.memory_space<vmem>>, %arg6: memref<1x32xf32, #tpu.memory_space<vmem>>, %arg7: memref<96x32xf32, #tpu.memory_space<vmem>>, %arg8: memref<1x32xf32, #tpu.memory_space<vmem>>, %arg9: memref<4x32xf32, #tpu.memory_space<vmem>>, %arg10: memref<1x32xf32, #tpu.memory_space<vmem>>, %arg11: memref<4x32xf32, #tpu.memory_space<vmem>>, %arg12: memref<1x32xf32, #tpu.memory_space<vmem>>, %arg13: memref<2x8xf32, #tpu.memory_space<vmem>>) attributes {dimension_semantics = [#tpu.dimension_semantics<arbitrary>], iteration_bounds = array<i64: 1>, scalar_prefetch = 0 : i64, scratch_operands = 0 : i64, tpu.core_type = #tpu.core_type<tc>, window_params = [{pipeline_mode = #tpu.pipeline_mode<synchronous>, transform_indices = @transform_0, window_bounds = array<i64: 2, 96>}, {pipeline_mode = #tpu.pipeline_mode<synchronous>, transform_indices = @transform_1, window_bounds = array<i64: 2, 96>}, {pipeline_mode = #tpu.pipeline_mode<synchronous>, transform_indices = @transform_2, window_bounds = array<i64: 2, 4>}, {pipeline_mode = #tpu.pipeline_mode<synchronous>, transform_indices = @transform_3, window_bounds = array<i64: 2, 8, 4>}, {pipeline_mode = #tpu.pipeline_mode<synchronous>, transform_indices = @transform_4, window_bounds = array<i64: 96, 32>}, {pipeline_mode = #tpu.pipeline_mode<synchronous>, transform_indices = @transform_5, window_bounds = array<i64: 1, 32>}, {pipeline_mode = #tpu.pipeline_mode<synchronous>, transform_indices = @transform_6, window_bounds = array<i64: 96, 32>}, {pipeline_mode = #tpu.pipeline_mode<synchronous>, transform_indices = @transform_7, window_bounds = array<i64: 1, 32>}, {pipeline_mode = #tpu.pipeline_mode<synchronous>, transform_indices = @transform_8, window_bounds = array<i64: 4, 32>}, {pipeline_mode = #tpu.pipeline_mode<synchronous>, transform_indices = @transform_9, window_bounds = array<i64: 1, 32>}, {pipeline_mode = #tpu.pipeline_mode<synchronous>, transform_indices = @transform_10, window_bounds = array<i64: 4, 32>}, {pipeline_mode = #tpu.pipeline_mode<synchronous>, transform_indices = @transform_11, window_bounds = array<i64: 1, 32>}, {pipeline_mode = #tpu.pipeline_mode<synchronous>, transform_indices = @transform_12, window_bounds = array<i64: 2, 8>}]} {
    %c0 = arith.constant 0 : index
    %c0_0 = arith.constant 0 : index
    %0 = vector.load %arg1[%c0, %c0_0] : memref<2x96xf32, #tpu.memory_space<vmem>>, vector<2x96xf32>
    %cst = arith.constant 1.000000e+00 : f32
    %1 = vector.broadcast %cst : f32 to vector<2x96xf32>
    %2 = arith.mulf %0, %1 : vector<2x96xf32>
    %c0_1 = arith.constant 0 : index
    %c0_2 = arith.constant 0 : index
    %3 = vector.load %arg3[%c0_1, %c0_2] : memref<2x4xf32, #tpu.memory_space<vmem>>, vector<2x4xf32>
    %c0_3 = arith.constant 0 : index
    %c0_4 = arith.constant 0 : index
    %4 = vector.load %arg10[%c0_3, %c0_4] : memref<1x32xf32, #tpu.memory_space<vmem>>, vector<1x32xf32>
    %5 = vector.extract_strided_slice %3 {offsets = [0, 0], sizes = [2, 1], strides = [1, 1]} : vector<2x4xf32> to vector<2x1xf32>
    %c0_5 = arith.constant 0 : index
    %c0_6 = arith.constant 0 : index
    %6 = vector.load %arg9[%c0_5, %c0_6] : memref<4x32xf32, #tpu.memory_space<vmem>>, vector<1x32xf32>
    %7 = vector.broadcast %5 : vector<2x1xf32> to vector<2x32xf32>
    %8 = vector.broadcast %6 : vector<1x32xf32> to vector<2x32xf32>
    %9 = arith.mulf %7, %8 : vector<2x32xf32>
    %10 = vector.broadcast %4 : vector<1x32xf32> to vector<2x32xf32>
    %11 = arith.addf %10, %9 : vector<2x32xf32>
    %12 = vector.extract_strided_slice %3 {offsets = [0, 1], sizes = [2, 1], strides = [1, 1]} : vector<2x4xf32> to vector<2x1xf32>
    %c1 = arith.constant 1 : index
    %c0_7 = arith.constant 0 : index
    %13 = vector.load %arg9[%c1, %c0_7] : memref<4x32xf32, #tpu.memory_space<vmem>>, vector<1x32xf32>
    %14 = vector.broadcast %12 : vector<2x1xf32> to vector<2x32xf32>
    %15 = vector.broadcast %13 : vector<1x32xf32> to vector<2x32xf32>
    %16 = arith.mulf %14, %15 : vector<2x32xf32>
    %17 = arith.addf %11, %16 : vector<2x32xf32>
    %18 = vector.extract_strided_slice %3 {offsets = [0, 2], sizes = [2, 1], strides = [1, 1]} : vector<2x4xf32> to vector<2x1xf32>
    %c2 = arith.constant 2 : index
    %c0_8 = arith.constant 0 : index
    %19 = vector.load %arg9[%c2, %c0_8] : memref<4x32xf32, #tpu.memory_space<vmem>>, vector<1x32xf32>
    %20 = vector.broadcast %18 : vector<2x1xf32> to vector<2x32xf32>
    %21 = vector.broadcast %19 : vector<1x32xf32> to vector<2x32xf32>
    %22 = arith.mulf %20, %21 : vector<2x32xf32>
    %23 = arith.addf %17, %22 : vector<2x32xf32>
    %24 = vector.extract_strided_slice %3 {offsets = [0, 3], sizes = [2, 1], strides = [1, 1]} : vector<2x4xf32> to vector<2x1xf32>
    %c3 = arith.constant 3 : index
    %c0_9 = arith.constant 0 : index
    %25 = vector.load %arg9[%c3, %c0_9] : memref<4x32xf32, #tpu.memory_space<vmem>>, vector<1x32xf32>
    %26 = vector.broadcast %24 : vector<2x1xf32> to vector<2x32xf32>
    %27 = vector.broadcast %25 : vector<1x32xf32> to vector<2x32xf32>
    %28 = arith.mulf %26, %27 : vector<2x32xf32>
    %29 = arith.addf %23, %28 : vector<2x32xf32>
    %cst_10 = arith.constant 1.000000e+00 : f32
    %30 = vector.broadcast %cst_10 : f32 to vector<2x32xf32>
    %31 = arith.mulf %29, %30 : vector<2x32xf32>
    %32 = arith.truncf %2 : vector<2x96xf32> to vector<2x96xbf16>
    %c0_11 = arith.constant 0 : index
    %c0_12 = arith.constant 0 : index
    %33 = vector.load %arg5[%c0_11, %c0_12] : memref<96x32xf32, #tpu.memory_space<vmem>>, vector<96x32xf32>
    %34 = arith.truncf %33 : vector<96x32xf32> to vector<96x32xbf16>
    %cst_13 = arith.constant dense<0.000000e+00> : vector<2x32xf32>
    %35 = tpu.matmul %32, %34, %cst_13 {dimension_numbers = #tpu.dot_dimension_numbers<[1], [0], [0], [1], [0, 0, 1, 1], [], []>} : vector<2x96xbf16>, vector<96x32xbf16>, vector<2x32xf32> -> vector<2x32xf32>
    %c0_14 = arith.constant 0 : index
    %c0_15 = arith.constant 0 : index
    %36 = vector.load %arg6[%c0_14, %c0_15] : memref<1x32xf32, #tpu.memory_space<vmem>>, vector<1x32xf32>
    %37 = vector.broadcast %36 : vector<1x32xf32> to vector<2x32xf32>
    %38 = arith.addf %35, %37 : vector<2x32xf32>
    %cst_16 = arith.constant 0.000000e+00 : f32
    %39 = vector.broadcast %cst_16 : f32 to vector<2x32xf32>
    %40 = arith.maximumf %38, %39 : vector<2x32xf32>
    %41 = arith.addf %40, %31 : vector<2x32xf32>
    %c0_17 = arith.constant 0 : index
    %c0_18 = arith.constant 0 : index
    %42 = vector.load %arg2[%c0_17, %c0_18] : memref<2x96xf32, #tpu.memory_space<vmem>>, vector<2x96xf32>
    %43 = arith.truncf %42 : vector<2x96xf32> to vector<2x96xbf16>
    %c0_19 = arith.constant 0 : index
    %c0_20 = arith.constant 0 : index
    %44 = vector.load %arg7[%c0_19, %c0_20] : memref<96x32xf32, #tpu.memory_space<vmem>>, vector<96x32xf32>
    %45 = arith.truncf %44 : vector<96x32xf32> to vector<96x32xbf16>
    %cst_21 = arith.constant dense<0.000000e+00> : vector<2x32xf32>
    %46 = tpu.matmul %43, %45, %cst_21 {dimension_numbers = #tpu.dot_dimension_numbers<[1], [0], [0], [1], [0, 0, 1, 1], [], []>} : vector<2x96xbf16>, vector<96x32xbf16>, vector<2x32xf32> -> vector<2x32xf32>
    %c0_22 = arith.constant 0 : index
    %c0_23 = arith.constant 0 : index
    %47 = vector.load %arg8[%c0_22, %c0_23] : memref<1x32xf32, #tpu.memory_space<vmem>>, vector<1x32xf32>
    %48 = vector.broadcast %47 : vector<1x32xf32> to vector<2x32xf32>
    %49 = arith.addf %46, %48 : vector<2x32xf32>
    %cst_24 = arith.constant 0.000000e+00 : f32
    %50 = vector.broadcast %cst_24 : f32 to vector<2x32xf32>
    %51 = arith.maximumf %49, %50 : vector<2x32xf32>
    %52 = arith.mulf %41, %51 : vector<2x32xf32>
    %c0_25 = arith.constant 0 : index
    %c0_26 = arith.constant 0 : index
    %c0_27 = arith.constant 0 : index
    %53 = vector.load %arg4[%c0_25, %c0_26, %c0_27] : memref<2x8x4xf32, #tpu.memory_space<vmem>>, vector<2x8x4xf32>
    %c0_28 = arith.constant 0 : index
    %c0_29 = arith.constant 0 : index
    %54 = vector.load %arg12[%c0_28, %c0_29] : memref<1x32xf32, #tpu.memory_space<vmem>>, vector<1x32xf32>
    %55 = vector.extract_strided_slice %53 {offsets = [0, 0, 0], sizes = [2, 8, 1], strides = [1, 1, 1]} : vector<2x8x4xf32> to vector<2x8x1xf32>
    %c0_30 = arith.constant 0 : index
    %c0_31 = arith.constant 0 : index
    %56 = vector.load %arg11[%c0_30, %c0_31] : memref<4x32xf32, #tpu.memory_space<vmem>>, vector<1x32xf32>
    %57 = vector.shape_cast %56 : vector<1x32xf32> to vector<1x1x32xf32>
    %58 = vector.broadcast %55 : vector<2x8x1xf32> to vector<2x8x32xf32>
    %59 = vector.broadcast %57 : vector<1x1x32xf32> to vector<2x8x32xf32>
    %60 = arith.mulf %58, %59 : vector<2x8x32xf32>
    %61 = vector.shape_cast %54 : vector<1x32xf32> to vector<1x1x32xf32>
    %62 = vector.broadcast %61 : vector<1x1x32xf32> to vector<2x8x32xf32>
    %63 = arith.addf %62, %60 : vector<2x8x32xf32>
    %64 = vector.extract_strided_slice %53 {offsets = [0, 0, 1], sizes = [2, 8, 1], strides = [1, 1, 1]} : vector<2x8x4xf32> to vector<2x8x1xf32>
    %c1_32 = arith.constant 1 : index
    %c0_33 = arith.constant 0 : index
    %65 = vector.load %arg11[%c1_32, %c0_33] : memref<4x32xf32, #tpu.memory_space<vmem>>, vector<1x32xf32>
    %66 = vector.shape_cast %65 : vector<1x32xf32> to vector<1x1x32xf32>
    %67 = vector.broadcast %64 : vector<2x8x1xf32> to vector<2x8x32xf32>
    %68 = vector.broadcast %66 : vector<1x1x32xf32> to vector<2x8x32xf32>
    %69 = arith.mulf %67, %68 : vector<2x8x32xf32>
    %70 = arith.addf %63, %69 : vector<2x8x32xf32>
    %71 = vector.extract_strided_slice %53 {offsets = [0, 0, 2], sizes = [2, 8, 1], strides = [1, 1, 1]} : vector<2x8x4xf32> to vector<2x8x1xf32>
    %c2_34 = arith.constant 2 : index
    %c0_35 = arith.constant 0 : index
    %72 = vector.load %arg11[%c2_34, %c0_35] : memref<4x32xf32, #tpu.memory_space<vmem>>, vector<1x32xf32>
    %73 = vector.shape_cast %72 : vector<1x32xf32> to vector<1x1x32xf32>
    %74 = vector.broadcast %71 : vector<2x8x1xf32> to vector<2x8x32xf32>
    %75 = vector.broadcast %73 : vector<1x1x32xf32> to vector<2x8x32xf32>
    %76 = arith.mulf %74, %75 : vector<2x8x32xf32>
    %77 = arith.addf %70, %76 : vector<2x8x32xf32>
    %78 = vector.extract_strided_slice %53 {offsets = [0, 0, 3], sizes = [2, 8, 1], strides = [1, 1, 1]} : vector<2x8x4xf32> to vector<2x8x1xf32>
    %c3_36 = arith.constant 3 : index
    %c0_37 = arith.constant 0 : index
    %79 = vector.load %arg11[%c3_36, %c0_37] : memref<4x32xf32, #tpu.memory_space<vmem>>, vector<1x32xf32>
    %80 = vector.shape_cast %79 : vector<1x32xf32> to vector<1x1x32xf32>
    %81 = vector.broadcast %78 : vector<2x8x1xf32> to vector<2x8x32xf32>
    %82 = vector.broadcast %80 : vector<1x1x32xf32> to vector<2x8x32xf32>
    %83 = arith.mulf %81, %82 : vector<2x8x32xf32>
    %84 = arith.addf %77, %83 : vector<2x8x32xf32>
    %85 = vector.shape_cast %52 : vector<2x32xf32> to vector<2x1x32xf32>
    %86 = vector.broadcast %85 : vector<2x1x32xf32> to vector<2x8x32xf32>
    %87 = arith.mulf %86, %84 : vector<2x8x32xf32>
    %cst_38 = arith.constant dense<0.000000e+00> : vector<2x8xf32>
    %88 = vector.multi_reduction <add>, %87, %cst_38 [2] : vector<2x8x32xf32> to vector<2x8xf32>
    %c0_39 = arith.constant 0 : index
    %c0_40 = arith.constant 0 : index
    %89 = vector.load %arg13[%c0_39, %c0_40] : memref<2x8xf32, #tpu.memory_space<vmem>>, vector<2x8xf32>
    tpu.vector_store %arg13[%c0_39, %c0_40], %88 {strides = array<i32>} : memref<2x8xf32, #tpu.memory_space<vmem>>, vector<2x8xf32>,
    return
  }
  func.func @transform_0(%arg0: i32) -> (i32, i32) {
    %c0_i32 = arith.constant 0 : i32
    %c0_i32_0 = arith.constant 0 : i32
    %c0_i32_1 = arith.constant 0 : i32
    return %c0_i32, %c0_i32_0 : i32, i32
  }
  func.func @transform_1(%arg0: i32) -> (i32, i32) {
    %c0_i32 = arith.constant 0 : i32
    %c0_i32_0 = arith.constant 0 : i32
    %c0_i32_1 = arith.constant 0 : i32
    return %c0_i32, %c0_i32_0 : i32, i32
  }
  func.func @transform_2(%arg0: i32) -> (i32, i32) {
    %c0_i32 = arith.constant 0 : i32
    %c0_i32_0 = arith.constant 0 : i32
    %c0_i32_1 = arith.constant 0 : i32
    return %c0_i32, %c0_i32_0 : i32, i32
  }
  func.func @transform_3(%arg0: i32) -> (i32, i32, i32) {
    %c0_i32 = arith.constant 0 : i32
    %c0_i32_0 = arith.constant 0 : i32
    %c0_i32_1 = arith.constant 0 : i32
    %c0_i32_2 = arith.constant 0 : i32
    return %c0_i32, %c0_i32_0, %c0_i32_1 : i32, i32, i32
  }
  func.func @transform_4(%arg0: i32) -> (i32, i32) {
    %c0_i32 = arith.constant 0 : i32
    %c0_i32_0 = arith.constant 0 : i32
    %c0_i32_1 = arith.constant 0 : i32
    return %c0_i32, %c0_i32_0 : i32, i32
  }
  func.func @transform_5(%arg0: i32) -> (i32, i32) {
    %c0_i32 = arith.constant 0 : i32
    %c0_i32_0 = arith.constant 0 : i32
    %c0_i32_1 = arith.constant 0 : i32
    return %c0_i32, %c0_i32_0 : i32, i32
  }
  func.func @transform_6(%arg0: i32) -> (i32, i32) {
    %c0_i32 = arith.constant 0 : i32
    %c0_i32_0 = arith.constant 0 : i32
    %c0_i32_1 = arith.constant 0 : i32
    return %c0_i32, %c0_i32_0 : i32, i32
  }
  func.func @transform_7(%arg0: i32) -> (i32, i32) {
    %c0_i32 = arith.constant 0 : i32
    %c0_i32_0 = arith.constant 0 : i32
    %c0_i32_1 = arith.constant 0 : i32
    return %c0_i32, %c0_i32_0 : i32, i32
  }
  func.func @transform_8(%arg0: i32) -> (i32, i32) {
    %c0_i32 = arith.constant 0 : i32
    %c0_i32_0 = arith.constant 0 : i32
    %c0_i32_1 = arith.constant 0 : i32
    return %c0_i32, %c0_i32_0 : i32, i32
  }
  func.func @transform_9(%arg0: i32) -> (i32, i32) {
    %c0_i32 = arith.constant 0 : i32
    %c0_i32_0 = arith.constant 0 : i32
    %c0_i32_1 = arith.constant 0 : i32
    return %c0_i32, %c0_i32_0 : i32, i32
  }
  func.func @transform_10(%arg0: i32) -> (i32, i32) {
    %c0_i32 = arith.constant 0 : i32
    %c0_i32_0 = arith.constant 0 : i32
    %c0_i32_1 = arith.constant 0 : i32
    return %c0_i32, %c0_i32_0 : i32, i32
  }
  func.func @transform_11(%arg0: i32) -> (i32, i32) {
    %c0_i32 = arith.constant 0 : i32
    %c0_i32_0 = arith.constant 0 : i32
    %c0_i32_1 = arith.constant 0 : i32
    return %c0_i32, %c0_i32_0 : i32, i32
  }
  func.func @transform_12(%arg0: i32) -> (i32, i32) {
    %c0_i32 = arith.constant 0 : i32
    %c0_i32_0 = arith.constant 0 : i32
    %c0_i32_1 = arith.constant 0 : i32
    return %c0_i32, %c0_i32_0 : i32, i32
  }
}

</mosaic_0001>

<llo_original>
// kernel: atomnet_det_forward.2
$region0: #{atomnet_det_forward.2}
  #allocation0 [shape = 'u32[]', space=smem, size = 0x4, offset = 0x4, fixed_abs, tag = 'smem constant byte address 0x4 - core index']
  #allocation1 [shape = 'u32[144,128]{1,0:T(1,128)}', space=vmem, size = 0x12000, scoped, tag = 'internal scratch']
  #allocation2 [shape = 'f32[8,32]{1,0:T(8,128)}', space=vmem, size = 0x1000, scoped, tag = 'scratch operand']
  #allocation3 [shape = 'f32[8,64]{1,0:T(8,128)}', space=vmem, size = 0x1000, scoped, tag = 'scratch operand']
  %s0 = inlined_call_operand.vmem [shape: bf16[4,6,256], index: 0, kind: input, shape index: {}]
  %s1 = inlined_call_operand.vmem [shape: bf16[4,6,64], index: 1, kind: input, shape index: {}]
  %s2 = inlined_call_operand.vmem [shape: f32[32,3], index: 2, kind: input, shape index: {}]
  %s3 = inlined_call_operand.vmem [shape: f32[32,1], index: 3, kind: input, shape index: {}]
  %s4 = inlined_call_operand.vmem [shape: f32[32,3], index: 4, kind: input, shape index: {}]
  %s5 = inlined_call_operand.vmem [shape: f32[32,1], index: 5, kind: input, shape index: {}]
  %s6 = inlined_call_operand.vmem [shape: bf16[128,64], index: 6, kind: input, shape index: {}]
  %s7 = inlined_call_operand.vmem [shape: f32[128,1], index: 7, kind: input, shape index: {}]
  %s8 = inlined_call_operand.vmem [shape: f32[4,1,96], index: 8, kind: output, shape index: {}]
  %s9 = sld [smem:[#allocation0]]
  $region73: #{atomnet_det_forward.2} parent=0
    _
  %s11 = ssub.s32 1, %s9
  %s12 = scalar_select 0, %s11, %s9
  loop: start=0, step=1, limit=6
  $region2: #{atomnet_det_forward.2} parent=0 // loop_pre_header
    _
  $region3: #{atomnet_det_forward.2} parent=0 // loop_header
    %s14 = sphi 0, %s18
    %p15 = scmp.ge.s32.totalorder %s14, 6
    %s21 = sphi 0, %s33
    %s22 = sphi 0, %s29
    %s23 = sphi 0, %s21
    %s24 = sphi 0, %s22
    %s25 = sphi 0, %s23
    %s26 = sphi 0, %s24
    %s38 = sphi 0, %s40
    %s41 = sphi 0, %s38
    %s42 = sphi 0, %s41
    %s58 = sphi 0, %s42
    %s66 = sphi 0, %s68
    %s69 = sphi 0, %s66
    %s70 = sphi 0, %s69
    %s86 = sphi 0, %s70
    %s90 = sphi 0, %s90
    %s92 = sphi 0, %s90
    %s93 = sphi 0, %s92
    %s107 = sphi 0, %s93
    %s111 = sphi 0, %s111
    %s113 = sphi 0, %s111
    %s114 = sphi 0, %s113
    %s128 = sphi 0, %s114
    %s132 = sphi 0, %s132
    %s134 = sphi 0, %s132
    %s135 = sphi 0, %s134
    %s149 = sphi 0, %s135
    %s153 = sphi 0, %s153
    %s155 = sphi 0, %s153
    %s156 = sphi 0, %s155
    %s170 = sphi 0, %s156
    %s174 = sphi 0, %s174
    %s176 = sphi 0, %s174
    %s177 = sphi 0, %s176
    %s191 = sphi 0, %s177
    %s195 = sphi 0, %s195
    %s197 = sphi 0, %s195
    %s198 = sphi 0, %s197
    %s212 = sphi 0, %s198
    %s218 = sphi 0, %s220
    %s221 = sphi 0, %s218
    %s222 = sphi 0, %s221
    %s238 = sphi 0, %s222
  $region4: #{atomnet_det_forward.2} parent=0 // loop_header_branch
    %17 = sbr.rel (%p15) target = $region8
  $region5: #{atomnet_det_forward.2} parent=0 // loop_body
    %s19 = ssub.s32 %s14, 1
    %s20 = ssub.s32 %s14, 2
    %s27 = sadd.s32 1, %s22
    %p28 = scmp.ge.s32.totalorder %s27, 1
    %s29 = scalar_select %p28, 0, %s27
    %s30 = sadd.s32 1, %s21
    %s31 = scalar_select %p28, %s30, %s21
    %p32 = scmp.ge.s32.totalorder %s31, 4
    %s33 = scalar_select %p32, 0, %s31
    %s34 = ssub.s32 %s21, %s33
    %s35 = ssub.s32 %s22, %s29
    %s36 = sor.u32 %s34, %s35
    %p37 = scmp.eq.s32.totalorder %s36, 0
    %s39 = sadd.s32 %s38, 1
    %s40 = scalar_select %p37, %s38, %s39
    %p43 = pneg %p37
    %p44 = scmp.eq.s32.totalorder %s14, 3
    %p45 = por %p43, %p44
    %p46 = scmp.ne.s32.totalorder %s38, %s41
    %p47 = scmp.eq.s32.totalorder %s14, 0
    %p48 = por %p46, %p47
    %p49 = scmp.ne.s32.totalorder %s38, %s41
    %p50 = scmp.eq.s32.totalorder %s19, 3
    %p51 = por %p49, %p50
    %p52 = scmp.ne.s32.totalorder %s41, %s42
    %p53 = scmp.eq.s32.totalorder %s19, 0
    %p54 = por %p52, %p53
    %p55 = scmp.ne.s32.totalorder %s41, %s42
    %p56 = scmp.eq.s32.totalorder %s20, 3
    %p57 = por %p55, %p56
    %p59 = scmp.ne.s32.totalorder %s42, %s58
    %p60 = scmp.eq.s32.totalorder %s20, 0
    %p61 = por %p59, %p60
    %s62 = ssub.s32 %s21, %s33
    %s63 = ssub.s32 %s22, %s29
    %s64 = sor.u32 %s62, %s63
    %p65 = scmp.eq.s32.totalorder %s64, 0
    %s67 = sadd.s32 %s66, 1
    %s68 = scalar_select %p65, %s66, %s67
    %p71 = pneg %p65
    %p72 = scmp.eq.s32.totalorder %s14, 3
    %p73 = por %p71, %p72
    %p74 = scmp.ne.s32.totalorder %s66, %s69
    %p75 = scmp.eq.s32.totalorder %s14, 0
    %p76 = por %p74, %p75
    %p77 = scmp.ne.s32.totalorder %s66, %s69
    %p78 = scmp.eq.s32.totalorder %s19, 3
    %p79 = por %p77, %p78
    %p80 = scmp.ne.s32.totalorder %s69, %s70
    %p81 = scmp.eq.s32.totalorder %s19, 0
    %p82 = por %p80, %p81
    %p83 = scmp.ne.s32.totalorder %s69, %s70
    %p84 = scmp.eq.s32.totalorder %s20, 3
    %p85 = por %p83, %p84
    %p87 = scmp.ne.s32.totalorder %s70, %s86
    %p88 = scmp.eq.s32.totalorder %s20, 0
    %p89 = por %p87, %p88
    %s91 = sadd.s32 %s90, 1
    %p94 = scmp.eq.s32.totalorder %s14, 3
    %p95 = scmp.ne.s32.totalorder %s90, %s92
    %p96 = scmp.eq.s32.totalorder %s14, 0
    %p97 = por %p95, %p96
    %p98 = scmp.ne.s32.totalorder %s90, %s92
    %p99 = scmp.eq.s32.totalorder %s19, 3
    %p100 = por %p98, %p99
    %p101 = scmp.ne.s32.totalorder %s92, %s93
    %p102 = scmp.eq.s32.totalorder %s19, 0
    %p103 = por %p101, %p102
    %p104 = scmp.ne.s32.totalorder %s92, %s93
    %p105 = scmp.eq.s32.totalorder %s20, 3
    %p106 = por %p104, %p105
    %p108 = scmp.ne.s32.totalorder %s93, %s107
    %p109 = scmp.eq.s32.totalorder %s20, 0
    %p110 = por %p108, %p109
    %s112 = sadd.s32 %s111, 1
    %p115 = scmp.eq.s32.totalorder %s14, 3
    %p116 = scmp.ne.s32.totalorder %s111, %s113
    %p117 = scmp.eq.s32.totalorder %s14, 0
    %p118 = por %p116, %p117
    %p119 = scmp.ne.s32.totalorder %s111, %s113
    %p120 = scmp.eq.s32.totalorder %s19, 3
    %p121 = por %p119, %p120
    %p122 = scmp.ne.s32.totalorder %s113, %s114
    %p123 = scmp.eq.s32.totalorder %s19, 0
    %p124 = por %p122, %p123
    %p125 = scmp.ne.s32.totalorder %s113, %s114
    %p126 = scmp.eq.s32.totalorder %s20, 3
    %p127 = por %p125, %p126
    %p129 = scmp.ne.s32.totalorder %s114, %s128
    %p130 = scmp.eq.s32.totalorder %s20, 0
    %p131 = por %p129, %p130
    %s133 = sadd.s32 %s132, 1
    %p136 = scmp.eq.s32.totalorder %s14, 3
    %p137 = scmp.ne.s32.totalorder %s132, %s134
    %p138 = scmp.eq.s32.totalorder %s14, 0
    %p139 = por %p137, %p138
    %p140 = scmp.ne.s32.totalorder %s132, %s134
    %p141 = scmp.eq.s32.totalorder %s19, 3
    %p142 = por %p140, %p141
    %p143 = scmp.ne.s32.totalorder %s134, %s135
    %p144 = scmp.eq.s32.totalorder %s19, 0
    %p145 = por %p143, %p144
    %p146 = scmp.ne.s32.totalorder %s134, %s135
    %p147 = scmp.eq.s32.totalorder %s20, 3
    %p148 = por %p146, %p147
    %p150 = scmp.ne.s32.totalorder %s135, %s149
    %p151 = scmp.eq.s32.totalorder %s20, 0
    %p152 = por %p150, %p151
    %s154 = sadd.s32 %s153, 1
    %p157 = scmp.eq.s32.totalorder %s14, 3
    %p158 = scmp.ne.s32.totalorder %s153, %s155
    %p159 = scmp.eq.s32.totalorder %s14, 0
    %p160 = por %p158, %p159
    %p161 = scmp.ne.s32.totalorder %s153, %s155
    %p162 = scmp.eq.s32.totalorder %s19, 3
    %p163 = por %p161, %p162
    %p164 = scmp.ne.s32.totalorder %s155, %s156
    %p165 = scmp.eq.s32.totalorder %s19, 0
    %p166 = por %p164, %p165
    %p167 = scmp.ne.s32.totalorder %s155, %s156
    %p168 = scmp.eq.s32.totalorder %s20, 3
    %p169 = por %p167, %p168
    %p171 = scmp.ne.s32.totalorder %s156, %s170
    %p172 = scmp.eq.s32.totalorder %s20, 0
    %p173 = por %p171, %p172
    %s175 = sadd.s32 %s174, 1
    %p178 = scmp.eq.s32.totalorder %s14, 3
    %p179 = scmp.ne.s32.totalorder %s174, %s176
    %p180 = scmp.eq.s32.totalorder %s14, 0
    %p181 = por %p179, %p180
    %p182 = scmp.ne.s32.totalorder %s174, %s176
    %p183 = scmp.eq.s32.totalorder %s19, 3
    %p184 = por %p182, %p183
    %p185 = scmp.ne.s32.totalorder %s176, %s177
    %p186 = scmp.eq.s32.totalorder %s19, 0
    %p187 = por %p185, %p186
    %p188 = scmp.ne.s32.totalorder %s176, %s177
    %p189 = scmp.eq.s32.totalorder %s20, 3
    %p190 = por %p188, %p189
    %p192 = scmp.ne.s32.totalorder %s177, %s191
    %p193 = scmp.eq.s32.totalorder %s20, 0
    %p194 = por %p192, %p193
    %s196 = sadd.s32 %s195, 1
    %p199 = scmp.eq.s32.totalorder %s14, 3
    %p200 = scmp.ne.s32.totalorder %s195, %s197
    %p201 = scmp.eq.s32.totalorder %s14, 0
    %p202 = por %p200, %p201
    %p203 = scmp.ne.s32.totalorder %s195, %s197
    %p204 = scmp.eq.s32.totalorder %s19, 3
    %p205 = por %p203, %p204
    %p206 = scmp.ne.s32.totalorder %s197, %s198
    %p207 = scmp.eq.s32.totalorder %s19, 0
    %p208 = por %p206, %p207
    %p209 = scmp.ne.s32.totalorder %s197, %s198
    %p210 = scmp.eq.s32.totalorder %s20, 3
    %p211 = por %p209, %p210
    %p213 = scmp.ne.s32.totalorder %s198, %s212
    %p214 = scmp.eq.s32.totalorder %s20, 0
    %p215 = por %p213, %p214
    %s216 = ssub.s32 %s21, %s33
    %p217 = scmp.eq.s32.totalorder %s216, 0
    %s219 = sadd.s32 %s218, 1
    %s220 = scalar_select %p217, %s218, %s219
    %p223 = pneg %p217
    %p224 = scmp.eq.s32.totalorder %s14, 3
    %p225 = por %p223, %p224
    %p226 = scmp.ne.s32.totalorder %s218, %s221
    %p227 = scmp.eq.s32.totalorder %s14, 0
    %p228 = por %p226, %p227
    %p229 = scmp.ne.s32.totalorder %s218, %s221
    %p230 = scmp.eq.s32.totalorder %s19, 3
    %p231 = por %p229, %p230
    %p232 = scmp.ne.s32.totalorder %s221, %s222
    %p233 = scmp.eq.s32.totalorder %s19, 0
    %p234 = por %p232, %p233
    %p235 = scmp.ne.s32.totalorder %s221, %s222
    %p236 = scmp.eq.s32.totalorder %s20, 3
    %p237 = por %p235, %p236
    %p239 = scmp.ne.s32.totalorder %s222, %s238
    %p240 = scmp.eq.s32.totalorder %s20, 0
    %p241 = por %p239, %p240
    %p242 = scmp.le.s32.totalorder 1, %s14
    %p243 = scmp.lt.s32.totalorder %s14, 5
    %p244 = pnand %p242, %p243
    %p245 = pneg %p244
    // Predicated region
    $region9: #{atomnet_det_forward.2} parent=5 // pred_check
      _
    $region10: #{atomnet_det_forward.2} parent=5 // pred_check_branch
      %247 = sbr.rel (%p244) target = $region12
    $region11: #{atomnet_det_forward.2} parent=5 // pred_region
      %s248 = ssub.s32 %s14, 1
      // Predicated region
      $region13: #{atomnet_det_forward.2} parent=11 // pred_check
        %p249 = pneg %p103
      $region14: #{atomnet_det_forward.2} parent=11 // pred_check_branch
        %251 = sbr.rel (%p249) target = $region16
      $region15: #{atomnet_det_forward.2} parent=11 // pred_region
        _
      $region16: #{atomnet_det_forward.2} parent=11 // pred_fallthru
        _
      // Predicated region
      $region17: #{atomnet_det_forward.2} parent=11 // pred_check
        %p252 = pneg %p124
      $region18: #{atomnet_det_forward.2} parent=11 // pred_check_branch
        %254 = sbr.rel (%p252) target = $region20
      $region19: #{atomnet_det_forward.2} parent=11 // pred_region
        _
      $region20: #{atomnet_det_forward.2} parent=11 // pred_fallthru
        _
      // Predicated region
      $region21: #{atomnet_det_forward.2} parent=11 // pred_check
        %p255 = pneg %p145
      $region22: #{atomnet_det_forward.2} parent=11 // pred_check_branch
        %257 = sbr.rel (%p255) target = $region24
      $region23: #{atomnet_det_forward.2} parent=11 // pred_region
        _
      $region24: #{atomnet_det_forward.2} parent=11 // pred_fallthru
        _
      // Predicated region
      $region25: #{atomnet_det_forward.2} parent=11 // pred_check
        %p258 = pneg %p166
      $region26: #{atomnet_det_forward.2} parent=11 // pred_check_branch
        %260 = sbr.rel (%p258) target = $region28
      $region27: #{atomnet_det_forward.2} parent=11 // pred_region
        _
      $region28: #{atomnet_det_forward.2} parent=11 // pred_fallthru
        _
      // Predicated region
      $region29: #{atomnet_det_forward.2} parent=11 // pred_check
        %p261 = pneg %p187
      $region30: #{atomnet_det_forward.2} parent=11 // pred_check_branch
        %263 = sbr.rel (%p261) target = $region32
      $region31: #{atomnet_det_forward.2} parent=11 // pred_region
        _
      $region32: #{atomnet_det_forward.2} parent=11 // pred_fallthru
        _
      // Predicated region
      $region33: #{atomnet_det_forward.2} parent=11 // pred_check
        %p264 = pneg %p208
      $region34: #{atomnet_det_forward.2} parent=11 // pred_check_branch
        %266 = sbr.rel (%p264) target = $region36
      $region35: #{atomnet_det_forward.2} parent=11 // pred_region
        _
      $region36: #{atomnet_det_forward.2} parent=11 // pred_fallthru
        _
    $region12: #{atomnet_det_forward.2} parent=5 // pred_fallthru
      _
    %p267 = scmp.lt.s32.totalorder %s14, 4
    // Predicated region
    $region37: #{atomnet_det_forward.2} parent=5 // pred_check
      %p268 = pneg %p267
    $region38: #{atomnet_det_forward.2} parent=5 // pred_check_branch
      %270 = sbr.rel (%p268) target = $region40
    $region39: #{atomnet_det_forward.2} parent=5 // pred_region
      // Predicated region
      $region41: #{atomnet_det_forward.2} parent=39 // pred_check
        %p271 = pneg %p48
      $region42: #{atomnet_det_forward.2} parent=39 // pred_check_branch
        %273 = sbr.rel (%p271) target = $region44
      $region43: #{atomnet_det_forward.2} parent=39 // pred_region
        %s274 = smul.u32 2, %s22
        %p275 = scmp.lt.s32.totalorder %s21, 3
        %s276 = scalar_select %p275, %s21, 3
        %p277 = scmp.lt.s32.totalorder %s274, 1
        %s278 = scalar_select %p277, %s274, 1
        %s279 = smul.addr %s276, 2
        %s280 = sadd.s32 %s278, %s279
        %s281 = smul.addr %s280, 4
        %s282 = scalar_lea.vmem %s0, %s281
        %s283 = smul.u32 2, %s22
      $region44: #{atomnet_det_forward.2} parent=39 // pred_fallthru
        _
      // Predicated region
      $region45: #{atomnet_det_forward.2} parent=39 // pred_check
        %p284 = pneg %p76
      $region46: #{atomnet_det_forward.2} parent=39 // pred_check_branch
        %286 = sbr.rel (%p284) target = $region48
      $region47: #{atomnet_det_forward.2} parent=39 // pred_region
        %p287 = scmp.lt.s32.totalorder %s21, 3
        %s288 = scalar_select %p287, %s21, 3
        %p289 = scmp.lt.s32.totalorder %s22, 0
        %s290 = scalar_select %p289, %s22, 0
        %s291 = sadd.s32 %s290, %s288
        %s292 = smul.addr %s291, 4
        %s293 = scalar_lea.vmem %s1, %s292
      $region48: #{atomnet_det_forward.2} parent=39 // pred_fallthru
        _
    $region40: #{atomnet_det_forward.2} parent=5 // pred_fallthru
      _
    %p294 = scmp.le.s32.totalorder 1, %s14
    %p295 = scmp.lt.s32.totalorder %s14, 5
    %p296 = pnand %p294, %p295
    %p297 = pneg %p296
    // Predicated region
    $region49: #{atomnet_det_forward.2} parent=5 // pred_check
      _
    $region50: #{atomnet_det_forward.2} parent=5 // pred_check_branch
      %299 = sbr.rel (%p296) target = $region52
    $region51: #{atomnet_det_forward.2} parent=5 // pred_region
      %s300 = ssub.s32 %s14, 1
      %s301 = smul.u32 2, %s24
      %p302 = scmp.lt.s32.totalorder %s23, 3
      %s303 = scalar_select %p302, %s23, 3
      %p304 = scmp.lt.s32.totalorder %s301, 1
      %s305 = scalar_select %p304, %s301, 1
      %s306 = smul.addr %s303, 2
      %s307 = sadd.s32 %s305, %s306
      %s308 = smul.addr %s307, 4
      %s309 = scalar_lea.vmem %s0, %s308
      %p310 = pneg %p54
      %p311 = pneg %p51
      %p312 = scmp.lt.s32.totalorder %s23, 3
      %s313 = scalar_select %p312, %s23, 3
      %p314 = scmp.lt.s32.totalorder %s24, 0
      %s315 = scalar_select %p314, %s24, 0
      %s316 = sadd.s32 %s315, %s313
      %s317 = smul.addr %s316, 4
      %s318 = scalar_lea.vmem %s1, %s317
      %p319 = pneg %p82
      %p320 = pneg %p79
      %p321 = pneg %p103
      %p322 = pneg %p100
      %p323 = pneg %p124
      %p324 = pneg %p121
      %p325 = pneg %p145
      %p326 = pneg %p142
      %p327 = pneg %p166
      %p328 = pneg %p163
      %p329 = pneg %p187
      %p330 = pneg %p184
      %p331 = pneg %p208
      %p332 = pneg %p205
      %p333 = pneg %p234
      %p334 = pneg %p231
      %p335 = scmp.lt.s32.totalorder %s23, 3
      %s336 = scalar_select %p335, %s23, 3
      %s337 = scalar_lea.vmem %s8, %s336
      %s338 = smul.u32 2, %s24
      %p339 = scmp.lt.s32.totalorder %s23, 3
      %s340 = scalar_select %p339, %s23, 3
      %p341 = scmp.lt.s32.totalorder %s338, 1
      %s342 = scalar_select %p341, %s338, 1
      %s343 = smul.addr %s340, 2
      %s344 = sadd.s32 %s342, %s343
      %s345 = smul.addr %s344, 4
      %s346 = scalar_lea.vmem %s0, %s345
      %s347 = smul.u32 2, %s24
      %p348 = scmp.lt.s32.totalorder %s23, 3
      %s349 = scalar_select %p348, %s23, 3
      %p350 = scmp.lt.s32.totalorder %s24, 0
      %s351 = scalar_select %p350, %s24, 0
      %s352 = sadd.s32 %s351, %s349
      %s353 = smul.addr %s352, 4
      %s354 = scalar_lea.vmem %s1, %s353
      %p355 = scmp.lt.s32.totalorder %s23, 3
      %s356 = scalar_select %p355, %s23, 3
      %s357 = scalar_lea.vmem %s8, %s356
      %p361 = scmp.eq.s32.totalorder %s24, 0
      // Predicated region
      $region53: #{atomnet_det_forward.2} parent=51 // pred_check
        %p362 = pneg %p361
      $region54: #{atomnet_det_forward.2} parent=51 // pred_check_branch
        %364 = sbr.rel (%p362) target = $region56
      $region55: #{atomnet_det_forward.2} parent=51 // pred_region
        %vm365 = vcmask 261120
        %366 = vst.msk [vmem:[#allocation2] sm:$0xff] %vm365, 0.0
        %vm367 = vcmask 523264
        %368 = vst.msk [vmem:[#allocation3] sm:$0xff] %vm367, 0.0
      $region56: #{atomnet_det_forward.2} parent=51 // pred_fallthru
        _
      %v369 = vld [vmem:[%s2] sm:$0xff]
      %v370 = vld [vmem:[%s2 + $0x8] sm:$0xff]
      %v371 = vld [vmem:[%s2 + $0x10] sm:$0xff]
      %v372 = vld [vmem:[%s2 + $0x18] sm:$0xff]
      %v373 = vpack.c.bf16 %v370, %v369
      %v374 = vpack.c.bf16 %v372, %v371
      %v375 = vld [vmem:[%s3] sm:$0xff]
      %v376 = vld [vmem:[%s3 + $0x8] sm:$0xff]
      %v377 = vld [vmem:[%s3 + $0x10] sm:$0xff]
      %v378 = vld [vmem:[%s3 + $0x18] sm:$0xff]
      %v379 = vpack.c.bf16 %v376, %v375
      %v380 = vpack.c.bf16 %v378, %v377
      %v381 = vld [vmem:[%s346] sm:$0x33]
      %383 = vset.pattern.permute.xlu0 0
      %384 = vperm.xlu0 %383, %v373
      %v385 = vpop.permute.xlu0 %384
      %388 = vset.pattern.permute.xlu0 0
      %389 = vperm.xlu0 %388, %v374
      %v390 = vpop.permute.xlu0 %389
      %v393 = vunpack.c.l.b16 %v381
      %v394 = vunpack.c.h.b16 %v381
      %v395 = vpack.c.b16 %v393, %v393
      %v396 = vpack.c.b16 %v394, %v394
      %v398 = vpack.i.b16 %v395, %v395
      %v400 = vlaneseq
      %v401 = vshrl.u32 %v400, 7
      %v402 = vsub.s32 0, %v401
      %v403 = vrot.slane %v398, %v402
      %v405 = vpack.i.b16 %v396, %v396
      %v407 = vlaneseq
      %v408 = vshrl.u32 %v407, 7
      %v409 = vsub.s32 0, %v408
      %v410 = vrot.slane %v405, %v409
      %v411 = vmul.bf16 %v385, %v403
      %v412 = vmul.bf16 %v385, %v410
      %v413 = vmul.bf16 %v390, %v403
      %v414 = vmul.bf16 %v390, %v410
      %415 = vset.pattern.permute.xlu0 1
      %416 = vperm.xlu0 %415, %v373
      %v417 = vpop.permute.xlu0 %416
      %419 = vset.pattern.permute.xlu0 1
      %420 = vperm.xlu0 %419, %v374
      %v421 = vpop.permute.xlu0 %420
      %v423 = vshrl.u32 %v395, 16
      %v424 = vpack.i.b16 %v423, %v423
      %v426 = vlaneseq
      %v427 = vshrl.u32 %v426, 7
      %v428 = vsub.s32 0, %v427
      %v429 = vrot.slane %v424, %v428
      %v430 = vshrl.u32 %v396, 16
      %v431 = vpack.i.b16 %v430, %v430
      %v433 = vlaneseq
      %v434 = vshrl.u32 %v433, 7
      %v435 = vsub.s32 0, %v434
      %v436 = vrot.slane %v431, %v435
      %v437 = vmul.bf16 %v417, %v429
      %v438 = vmul.bf16 %v417, %v436
      %v439 = vmul.bf16 %v421, %v429
      %v440 = vmul.bf16 %v421, %v436
      %v441 = vadd.bf16 %v411, %v437
      %v442 = vadd.bf16 %v412, %v438
      %v443 = vadd.bf16 %v413, %v439
      %v444 = vadd.bf16 %v414, %v440
      %445 = vset.pattern.permute.xlu0 2
      %446 = vperm.xlu0 %445, %v373
      %v447 = vpop.permute.xlu0 %446
      %449 = vset.pattern.permute.xlu0 2
      %450 = vperm.xlu0 %449, %v374
      %v451 = vpop.permute.xlu0 %450
      %v453 = vlaneseq
      %v454 = vshrl.u32 %v453, 7
      %v455 = vsub.s32 1, %v454
      %v456 = vrot.slane %v398, %v455
      %v457 = vlaneseq
      %v458 = vshrl.u32 %v457, 7
      %v459 = vsub.s32 1, %v458
      %v460 = vrot.slane %v405, %v459
      %v461 = vmul.bf16 %v447, %v456
      %v462 = vmul.bf16 %v447, %v460
      %v463 = vmul.bf16 %v451, %v456
      %v464 = vmul.bf16 %v451, %v460
      %v465 = vadd.bf16 %v441, %v461
      %v466 = vadd.bf16 %v442, %v462
      %v467 = vadd.bf16 %v443, %v463
      %v468 = vadd.bf16 %v444, %v464
      %470 = vset.pattern.permute.xlu0 0
      %471 = vperm.xlu0 %470, %v379
      %v472 = vpop.permute.xlu0 %471
      %475 = vset.pattern.permute.xlu0 0
      %476 = vperm.xlu0 %475, %v380
      %v477 = vpop.permute.xlu0 %476
      %v479 = vadd.bf16 %v465, %v472
      %v480 = vadd.bf16 %v466, %v472
      %v481 = vadd.bf16 %v467, %v477
      %v482 = vadd.bf16 %v468, %v477
      %v483 = vmax.bf16 %v479, 0
      %v484 = vmax.bf16 %v480, 0
      %v485 = vmax.bf16 %v481, 0
      %v486 = vmax.bf16 %v482, 0
      %v487 = vld [vmem:[%s4] sm:$0xff]
      %v488 = vld [vmem:[%s4 + $0x8] sm:$0xff]
      %v489 = vld [vmem:[%s4 + $0x10] sm:$0xff]
      %v490 = vld [vmem:[%s4 + $0x18] sm:$0xff]
      %v491 = vpack.c.bf16 %v488, %v487
      %v492 = vpack.c.bf16 %v490, %v489
      %v493 = vld [vmem:[%s5] sm:$0xff]
      %v494 = vld [vmem:[%s5 + $0x8] sm:$0xff]
      %v495 = vld [vmem:[%s5 + $0x10] sm:$0xff]
      %v496 = vld [vmem:[%s5 + $0x18] sm:$0xff]
      %v497 = vpack.c.bf16 %v494, %v493
      %v498 = vpack.c.bf16 %v496, %v495
      %v499 = vld [vmem:[%s346] sm:$0x66]
      %501 = vset.pattern.permute.xlu0 0
      %502 = vperm.xlu0 %501, %v491
      %v503 = vpop.permute.xlu0 %502
      %506 = vset.pattern.permute.xlu0 0
      %507 = vperm.xlu0 %506, %v492
      %v508 = vpop.permute.xlu0 %507
      %v511 = vunpack.c.l.b16 %v499
      %v512 = vunpack.c.h.b16 %v499
      %v513 = vpack.c.b16 %v511, %v511
      %v514 = vpack.c.b16 %v512, %v512
      %v516 = vshrl.u32 %v513, 16
      %v517 = vpack.i.b16 %v516, %v516
      %v519 = vlaneseq
      %v520 = vshrl.u32 %v519, 7
      %v521 = vsub.s32 1, %v520
      %v522 = vrot.slane %v517, %v521
      %v524 = vshrl.u32 %v514, 16
      %v525 = vpack.i.b16 %v524, %v524
      %v527 = vlaneseq
      %v528 = vshrl.u32 %v527, 7
      %v529 = vsub.s32 1, %v528
      %v530 = vrot.slane %v525, %v529
      %v531 = vmul.bf16 %v503, %v522
      %v532 = vmul.bf16 %v503, %v530
      %v533 = vmul.bf16 %v508, %v522
      %v534 = vmul.bf16 %v508, %v530
      %535 = vset.pattern.permute.xlu0 1
      %536 = vperm.xlu0 %535, %v491
      %v537 = vpop.permute.xlu0 %536
      %539 = vset.pattern.permute.xlu0 1
      %540 = vperm.xlu0 %539, %v492
      %v541 = vpop.permute.xlu0 %540
      %v543 = vpack.i.b16 %v513, %v513
      %v545 = vlaneseq
      %v546 = vshrl.u32 %v545, 7
      %v547 = vsub.s32 2, %v546
      %v548 = vrot.slane %v543, %v547
      %v549 = vpack.i.b16 %v514, %v514
      %v551 = vlaneseq
      %v552 = vshrl.u32 %v551, 7
      %v553 = vsub.s32 2, %v552
      %v554 = vrot.slane %v549, %v553
      %v555 = vmul.bf16 %v537, %v548
      %v556 = vmul.bf16 %v537, %v554
      %v557 = vmul.bf16 %v541, %v548
      %v558 = vmul.bf16 %v541, %v554
      %v559 = vadd.bf16 %v531, %v555
      %v560 = vadd.bf16 %v532, %v556
      %v561 = vadd.bf16 %v533, %v557
      %v562 = vadd.bf16 %v534, %v558
      %563 = vset.pattern.permute.xlu0 2
      %564 = vperm.xlu0 %563, %v491
      %v565 = vpop.permute.xlu0 %564
      %567 = vset.pattern.permute.xlu0 2
      %568 = vperm.xlu0 %567, %v492
      %v569 = vpop.permute.xlu0 %568
      %v571 = vlaneseq
      %v572 = vshrl.u32 %v571, 7
      %v573 = vsub.s32 2, %v572
      %v574 = vrot.slane %v517, %v573
      %v575 = vlaneseq
      %v576 = vshrl.u32 %v575, 7
      %v577 = vsub.s32 2, %v576
      %v578 = vrot.slane %v525, %v577
      %v579 = vmul.bf16 %v565, %v574
      %v580 = vmul.bf16 %v565, %v578
      %v581 = vmul.bf16 %v569, %v574
      %v582 = vmul.bf16 %v569, %v578
      %v583 = vadd.bf16 %v559, %v579
      %v584 = vadd.bf16 %v560, %v580
      %v585 = vadd.bf16 %v561, %v581
      %v586 = vadd.bf16 %v562, %v582
      %588 = vset.pattern.permute.xlu0 0
      %589 = vperm.xlu0 %588, %v497
      %v590 = vpop.permute.xlu0 %589
      %593 = vset.pattern.permute.xlu0 0
      %594 = vperm.xlu0 %593, %v498
      %v595 = vpop.permute.xlu0 %594
      %v597 = vadd.bf16 %v583, %v590
      %v598 = vadd.bf16 %v584, %v590
      %v599 = vadd.bf16 %v585, %v595
      %v600 = vadd.bf16 %v586, %v595
      %v601 = vmax.bf16 %v597, 0
      %v602 = vmax.bf16 %v598, 0
      %v603 = vmax.bf16 %v599, 0
      %v604 = vmax.bf16 %v600, 0
      %v605 = vmul.bf16 %v483, 1056980736
      %v606 = vmul.bf16 %v484, 1056980736
      %v607 = vmul.bf16 %v485, 1056980736
      %v608 = vmul.bf16 %v486, 1056980736
      %v609 = vmul.bf16 %v601, 1056980736
      %v610 = vmul.bf16 %v602, 1056980736
      %v611 = vmul.bf16 %v603, 1056980736
      %v612 = vmul.bf16 %v604, 1056980736
      %v613 = vadd.bf16 %v605, %v609
      %v614 = vadd.bf16 %v606, %v610
      %v615 = vadd.bf16 %v607, %v611
      %v616 = vadd.bf16 %v608, %v612
      %v617 = vld [vmem:[#allocation2] sm:$0xff]
      %618 = vmatprep.subr.bf16.mxu0 %v614
      %619 = vmatpush1.bf16.xpose.msra.mxu0 %v613
      %620 = vmatprep.subr.bf16.mxu0 %v616
      %621 = vmatpush1.bf16.xpose.msra.mxu0 %v615
      %622 = vmatprep.subr.bf16.mxu0 0
      %623 = vmatpush1.bf16.xpose.msra.mxu0 0
      %624 = vmatprep.subr.bf16.mxu0 0
      %625 = vmatpush1.bf16.xpose.msra.mxu0 0
      %626 = vmatprep.subr.bf16.mxu0 0
      %627 = vmatpush1.bf16.xpose.msra.mxu0 0
      %628 = vmatprep.subr.bf16.mxu0 0
      %629 = vmatpush1.bf16.xpose.msra.mxu0 0
      %630 = vmatprep.subr.bf16.mxu0 0
      %631 = vmatpush1.bf16.xpose.msra.mxu0 0
      %632 = vmatprep.subr.bf16.mxu0 0
      %633 = vmatpush1.bf16.xpose.msra.mxu0 0
      %634 = vmatprep.subr.bf16.mxu0 0
      %635 = vmatpush1.bf16.xpose.msra.mxu0 0
      %636 = vmatprep.subr.bf16.mxu0 0
      %637 = vmatpush1.bf16.xpose.msra.mxu0 0
      %638 = vmatprep.subr.bf16.mxu0 0
      %639 = vmatpush1.bf16.xpose.msra.mxu0 0
      %640 = vmatprep.subr.bf16.mxu0 0
      %641 = vmatpush1.bf16.xpose.msra.mxu0 0
      %642 = vmatprep.subr.bf16.mxu0 0
      %643 = vmatpush1.bf16.xpose.msra.mxu0 0
      %644 = vmatprep.subr.bf16.mxu0 0
      %645 = vmatpush1.bf16.xpose.msra.mxu0 0
      %646 = vmatprep.subr.bf16.mxu0 0
      %647 = vmatpush1.bf16.xpose.msra.mxu0 0
      %648 = vmatprep.subr.bf16.mxu0 0
      %649 = vmatpush1.bf16.xpose.msra.mxu0 0
      %650 = vmatprep.mubr.bf16.mxu0 1065369472
      %651 = vmatmul.mubr.bf16.gmra.mrb[0].mxu0 1065369472
      %v652 = vpop.f32.mrb[0].mxu0
      %v653 = vadd.f32 0.0, %v652
      %v654 = vpop.f32.mrb[0].mxu0
      %v655 = vpop.f32.mrb[0].mxu0
      %v656 = vpop.f32.mrb[0].mxu0
      %657 = vdwg.mxu0
      %v658 = vadd.f32 %v617, %v653
      %vm659 = vcmask 261120
      %660 = vst.msk [vmem:[#allocation2] sm:$0xff] %vm659, %v658
      %v661 = vld [vmem:[%s354] sm:$0x3]
      %v663 = vpack.i.b16 %v661, %v661
      %v665 = vlaneseq
      %v666 = vshrl.u32 %v665, 7
      %v667 = vsub.s32 0, %v666
      %v668 = vrot.slane %v663, %v667
      %v669 = vmul.bf16 %v385, %v668
      %v670 = vmul.bf16 %v390, %v668
      %v671 = vshrl.u32 %v661, 16
      %v672 = vpack.i.b16 %v671, %v671
      %v674 = vlaneseq
      %v675 = vshrl.u32 %v674, 7
      %v676 = vsub.s32 0, %v675
      %v677 = vrot.slane %v672, %v676
      %v678 = vmul.bf16 %v417, %v677
      %v679 = vmul.bf16 %v421, %v677
      %v680 = vadd.bf16 %v669, %v678
      %v681 = vadd.bf16 %v670, %v679
      %v682 = vlaneseq
      %v683 = vshrl.u32 %v682, 7
      %v684 = vsub.s32 1, %v683
      %v685 = vrot.slane %v663, %v684
      %v686 = vmul.bf16 %v447, %v685
      %v687 = vmul.bf16 %v451, %v685
      %v688 = vadd.bf16 %v680, %v686
      %v689 = vadd.bf16 %v681, %v687
      %v690 = vadd.bf16 %v688, %v472
      %v691 = vadd.bf16 %v689, %v477
      %v692 = vmax.bf16 %v690, 0
      %v693 = vmax.bf16 %v691, 0
      %v694 = vld [vmem:[%s354] sm:$0x6]
      %v696 = vshrl.u32 %v694, 16
      %v697 = vpack.i.b16 %v696, %v696
      %v699 = vlaneseq
      %v700 = vshrl.u32 %v699, 7
      %v701 = vsub.s32 1, %v700
      %v702 = vrot.slane %v697, %v701
      %v703 = vmul.bf16 %v503, %v702
      %v704 = vmul.bf16 %v508, %v702
      %v705 = vpack.i.b16 %v694, %v694
      %v707 = vlaneseq
      %v708 = vshrl.u32 %v707, 7
      %v709 = vsub.s32 2, %v708
      %v710 = vrot.slane %v705, %v709
      %v711 = vmul.bf16 %v537, %v710
      %v712 = vmul.bf16 %v541, %v710
      %v713 = vadd.bf16 %v703, %v711
      %v714 = vadd.bf16 %v704, %v712
      %v715 = vlaneseq
      %v716 = vshrl.u32 %v715, 7
      %v717 = vsub.s32 2, %v716
      %v718 = vrot.slane %v697, %v717
      %v719 = vmul.bf16 %v565, %v718
      %v720 = vmul.bf16 %v569, %v718
      %v721 = vadd.bf16 %v713, %v719
      %v722 = vadd.bf16 %v714, %v720
      %v723 = vadd.bf16 %v721, %v590
      %v724 = vadd.bf16 %v722, %v595
      %v725 = vmax.bf16 %v723, 0
      %v726 = vmax.bf16 %v724, 0
      %v727 = vld [vmem:[%s6] sm:$0xf]
      %v728 = vld [vmem:[%s6 + $0x4] sm:$0xf]
      %v729 = vld [vmem:[%s6 + $0x8] sm:$0xf]
      %v730 = vld [vmem:[%s6 + $0xc] sm:$0xf]
      %v731 = vld [vmem:[%s6 + $0x10] sm:$0xf]
      %v732 = vld [vmem:[%s6 + $0x14] sm:$0xf]
      %v733 = vld [vmem:[%s6 + $0x18] sm:$0xf]
      %v734 = vld [vmem:[%s6 + $0x1c] sm:$0xf]
      %v735 = vld [vmem:[%s6 + $0x20] sm:$0xf]
      %v736 = vld [vmem:[%s6 + $0x24] sm:$0xf]
      %v737 = vld [vmem:[%s6 + $0x28] sm:$0xf]
      %v738 = vld [vmem:[%s6 + $0x2c] sm:$0xf]
      %v739 = vld [vmem:[%s6 + $0x30] sm:$0xf]
      %v740 = vld [vmem:[%s6 + $0x34] sm:$0xf]
      %v741 = vld [vmem:[%s6 + $0x38] sm:$0xf]
      %v742 = vld [vmem:[%s6 + $0x3c] sm:$0xf]
      %v743 = vld [vmem:[%s7] sm:$0xff]
      %v744 = vld [vmem:[%s7 + $0x8] sm:$0xff]
      %v745 = vld [vmem:[%s7 + $0x10] sm:$0xff]
      %v746 = vld [vmem:[%s7 + $0x18] sm:$0xff]
      %v747 = vld [vmem:[%s7 + $0x20] sm:$0xff]
      %v748 = vld [vmem:[%s7 + $0x28] sm:$0xff]
      %v749 = vld [vmem:[%s7 + $0x30] sm:$0xff]
      %v750 = vld [vmem:[%s7 + $0x38] sm:$0xff]
      %v751 = vld [vmem:[%s7 + $0x40] sm:$0xff]
      %v752 = vld [vmem:[%s7 + $0x48] sm:$0xff]
      %v753 = vld [vmem:[%s7 + $0x50] sm:$0xff]
      %v754 = vld [vmem:[%s7 + $0x58] sm:$0xff]
      %v755 = vld [vmem:[%s7 + $0x60] sm:$0xff]
      %v756 = vld [vmem:[%s7 + $0x68] sm:$0xff]
      %v757 = vld [vmem:[%s7 + $0x70] sm:$0xff]
      %v758 = vld [vmem:[%s7 + $0x78] sm:$0xff]
      %760 = vset.pattern.permute.xlu0 0
      %761 = vperm.xlu0 %760, %v743
      %v762 = vpop.permute.xlu0 %761
      %765 = vset.pattern.permute.xlu0 0
      %766 = vperm.xlu0 %765, %v744
      %v767 = vpop.permute.xlu0 %766
      %770 = vset.pattern.permute.xlu0 0
      %771 = vperm.xlu0 %770, %v745
      %v772 = vpop.permute.xlu0 %771
      %775 = vset.pattern.permute.xlu0 0
      %776 = vperm.xlu0 %775, %v746
      %v777 = vpop.permute.xlu0 %776
      %780 = vset.pattern.permute.xlu0 0
      %781 = vperm.xlu0 %780, %v747
      %v782 = vpop.permute.xlu0 %781
      %785 = vset.pattern.permute.xlu0 0
      %786 = vperm.xlu0 %785, %v748
      %v787 = vpop.permute.xlu0 %786
      %790 = vset.pattern.permute.xlu0 0
      %791 = vperm.xlu0 %790, %v749
      %v792 = vpop.permute.xlu0 %791
      %795 = vset.pattern.permute.xlu0 0
      %796 = vperm.xlu0 %795, %v750
      %v797 = vpop.permute.xlu0 %796
      %800 = vset.pattern.permute.xlu0 0
      %801 = vperm.xlu0 %800, %v751
      %v802 = vpop.permute.xlu0 %801
      %805 = vset.pattern.permute.xlu0 0
      %806 = vperm.xlu0 %805, %v752
      %v807 = vpop.permute.xlu0 %806
      %810 = vset.pattern.permute.xlu0 0
      %811 = vperm.xlu0 %810, %v753
      %v812 = vpop.permute.xlu0 %811
      %815 = vset.pattern.permute.xlu0 0
      %816 = vperm.xlu0 %815, %v754
      %v817 = vpop.permute.xlu0 %816
      %820 = vset.pattern.permute.xlu0 0
      %821 = vperm.xlu0 %820, %v755
      %v822 = vpop.permute.xlu0 %821
      %825 = vset.pattern.permute.xlu0 0
      %826 = vperm.xlu0 %825, %v756
      %v827 = vpop.permute.xlu0 %826
      %830 = vset.pattern.permute.xlu0 0
      %831 = vperm.xlu0 %830, %v757
      %v832 = vpop.permute.xlu0 %831
      %835 = vset.pattern.permute.xlu0 0
      %836 = vperm.xlu0 %835, %v758
      %v837 = vpop.permute.xlu0 %836
      %v855 = vunpack.c.l.b16 %v727
      %v856 = vunpack.c.l.b16 %v728
      %v857 = vunpack.c.l.b16 %v729
      %v858 = vunpack.c.l.b16 %v730
      %v859 = vunpack.c.l.b16 %v731
      %v860 = vunpack.c.l.b16 %v732
      %v861 = vunpack.c.l.b16 %v733
      %v862 = vunpack.c.l.b16 %v734
      %v863 = vunpack.c.l.b16 %v735
      %v864 = vunpack.c.l.b16 %v736
      %v865 = vunpack.c.l.b16 %v737
      %v866 = vunpack.c.l.b16 %v738
      %v867 = vunpack.c.l.b16 %v739
      %v868 = vunpack.c.l.b16 %v740
      %v869 = vunpack.c.l.b16 %v741
      %v870 = vunpack.c.l.b16 %v742
      %v871 = vpack.c.b16 %v856, %v855
      %v872 = vpack.c.b16 %v858, %v857
      %v873 = vpack.c.b16 %v860, %v859
      %v874 = vpack.c.b16 %v862, %v861
      %v875 = vpack.c.b16 %v864, %v863
      %v876 = vpack.c.b16 %v866, %v865
      %v877 = vpack.c.b16 %v868, %v867
      %v878 = vpack.c.b16 %v870, %v869
      %vm879 = vcmask 523264
      %v881 = vsel %vm879, %v871, 0
      %v884 = vsel %vm879, %v872, 0
      %v887 = vsel %vm879, %v873, 0
      %v890 = vsel %vm879, %v874, 0
      %v893 = vsel %vm879, %v875, 0
      %v896 = vsel %vm879, %v876, 0
      %v899 = vsel %vm879, %v877, 0
      %v902 = vsel %vm879, %v878, 0
      %904 = vmatprep.subr.bf16.mxu0 0
      %905 = vmatpush1.bf16.msra.mxu0 %v692
      %906 = vmatprep.subr.bf16.mxu0 0
      %907 = vmatpush1.bf16.msra.mxu0 %v693
      %908 = vmatprep.subr.bf16.mxu0 0
      %909 = vmatpush1.bf16.msra.mxu0 %v725
      %910 = vmatprep.subr.bf16.mxu0 0
      %911 = vmatpush1.bf16.msra.mxu0 %v726
      %912 = vmatprep.subr.bf16.mxu0 0
      %913 = vmatpush1.bf16.msra.mxu0 0
      %914 = vmatprep.subr.bf16.mxu0 0
      %915 = vmatpush1.bf16.msra.mxu0 0
      %916 = vmatprep.subr.bf16.mxu0 0
      %917 = vmatpush1.bf16.msra.mxu0 0
      %918 = vmatprep.subr.bf16.mxu0 0
      %919 = vmatpush1.bf16.msra.mxu0 0
      %920 = vmatprep.subr.bf16.mxu0 0
      %921 = vmatpush1.bf16.msra.mxu0 0
      %922 = vmatprep.subr.bf16.mxu0 0
      %923 = vmatpush1.bf16.msra.mxu0 0
      %924 = vmatprep.subr.bf16.mxu0 0
      %925 = vmatpush1.bf16.msra.mxu0 0
      %926 = vmatprep.subr.bf16.mxu0 0
      %927 = vmatpush1.bf16.msra.mxu0 0
      %928 = vmatprep.subr.bf16.mxu0 0
      %929 = vmatpush1.bf16.msra.mxu0 0
      %930 = vmatprep.subr.bf16.mxu0 0
      %931 = vmatpush1.bf16.msra.mxu0 0
      %932 = vmatprep.subr.bf16.mxu0 0
      %933 = vmatpush1.bf16.msra.mxu0 0
      %934 = vmatprep.subr.bf16.mxu0 0
      %935 = vmatpush1.bf16.msra.mxu0 0
      %936 = vmatprep.mubr.bf16.mxu0 0
      %937 = vmatmul.mubr.bf16.gmra.mrb[0].mxu0 %v881
      %v938 = vpop.f32.mrb[0].mxu0
      %v939 = vadd.f32 %v762, %v938
      %v940 = vpop.f32.mrb[0].mxu0
      %v941 = vpop.f32.mrb[0].mxu0
      %v942 = vadd.f32 %v767, %v941
      %v943 = vpop.f32.mrb[0].mxu0
      %944 = vmatprep.mubr.bf16.mxu0 0
      %945 = vmatmul.mubr.bf16.gmra.mrb[0].mxu0 %v884
      %v946 = vpop.f32.mrb[0].mxu0
      %v947 = vadd.f32 %v772, %v946
      %v948 = vpop.f32.mrb[0].mxu0
      %v949 = vpop.f32.mrb[0].mxu0
      %v950 = vadd.f32 %v777, %v949
      %v951 = vpop.f32.mrb[0].mxu0
      %952 = vmatprep.mubr.bf16.mxu0 0
      %953 = vmatmul.mubr.bf16.gmra.mrb[0].mxu0 %v887
      %v954 = vpop.f32.mrb[0].mxu0
      %v955 = vadd.f32 %v782, %v954
      %v956 = vpop.f32.mrb[0].mxu0
      %v957 = vpop.f32.mrb[0].mxu0
      %v958 = vadd.f32 %v787, %v957
      %v959 = vpop.f32.mrb[0].mxu0
      %960 = vmatprep.mubr.bf16.mxu0 0
      %961 = vmatmul.mubr.bf16.gmra.mrb[0].mxu0 %v890
      %v962 = vpop.f32.mrb[0].mxu0
      %v963 = vadd.f32 %v792, %v962
      %v964 = vpop.f32.mrb[0].mxu0
      %v965 = vpop.f32.mrb[0].mxu0
      %v966 = vadd.f32 %v797, %v965
      %v967 = vpop.f32.mrb[0].mxu0
      %968 = vmatprep.mubr.bf16.mxu0 0
      %969 = vmatmul.mubr.bf16.gmra.mrb[0].mxu0 %v893
      %v970 = vpop.f32.mrb[0].mxu0
      %v971 = vadd.f32 %v802, %v970
      %v972 = vpop.f32.mrb[0].mxu0
      %v973 = vpop.f32.mrb[0].mxu0
      %v974 = vadd.f32 %v807, %v973
      %v975 = vpop.f32.mrb[0].mxu0
      %976 = vmatprep.mubr.bf16.mxu0 0
      %977 = vmatmul.mubr.bf16.gmra.mrb[0].mxu0 %v896
      %v978 = vpop.f32.mrb[0].mxu0
      %v979 = vadd.f32 %v812, %v978
      %v980 = vpop.f32.mrb[0].mxu0
      %v981 = vpop.f32.mrb[0].mxu0
      %v982 = vadd.f32 %v817, %v981
      %v983 = vpop.f32.mrb[0].mxu0
      %984 = vmatprep.mubr.bf16.mxu0 0
      %985 = vmatmul.mubr.bf16.gmra.mrb[0].mxu0 %v899
      %v986 = vpop.f32.mrb[0].mxu0
      %v987 = vadd.f32 %v822, %v986
      %v988 = vpop.f32.mrb[0].mxu0
      %v989 = vpop.f32.mrb[0].mxu0
      %v990 = vadd.f32 %v827, %v989
      %v991 = vpop.f32.mrb[0].mxu0
      %992 = vmatprep.mubr.bf16.mxu0 0
      %993 = vmatmul.mubr.bf16.gmra.mrb[0].mxu0 %v902
      %v994 = vpop.f32.mrb[0].mxu0
      %v995 = vadd.f32 %v832, %v994
      %v996 = vpop.f32.mrb[0].mxu0
      %v997 = vpop.f32.mrb[0].mxu0
      %v998 = vadd.f32 %v837, %v997
      %v999 = vpop.f32.mrb[0].mxu0
      %1000 = vdwg.mxu0
      %v1001 = vmax.f32 %v939, 0.0
      %v1002 = vmax.f32 %v942, 0.0
      %v1003 = vmax.f32 %v947, 0.0
      %v1004 = vmax.f32 %v950, 0.0
      %v1005 = vmax.f32 %v955, 0.0
      %v1006 = vmax.f32 %v958, 0.0
      %v1007 = vmax.f32 %v963, 0.0
      %v1008 = vmax.f32 %v966, 0.0
      %v1009 = vmax.f32 %v971, 0.0
      %v1010 = vmax.f32 %v974, 0.0
      %v1011 = vmax.f32 %v979, 0.0
      %v1012 = vmax.f32 %v982, 0.0
      %v1013 = vmax.f32 %v987, 0.0
      %v1014 = vmax.f32 %v990, 0.0
      %v1015 = vmax.f32 %v995, 0.0
      %v1016 = vmax.f32 %v998, 0.0
      %v1017 = vadd.f32 %v1001, %v1009
      %v1018 = vadd.f32 %v1002, %v1010
      %v1019 = vadd.f32 %v1003, %v1011
      %v1020 = vadd.f32 %v1004, %v1012
      %v1021 = vadd.f32 %v1005, %v1013
      %v1022 = vadd.f32 %v1006, %v1014
      %v1023 = vadd.f32 %v1007, %v1015
      %v1024 = vadd.f32 %v1008, %v1016
      %v1025 = vmul.f32 %v1017, 0.5
      %v1026 = vmul.f32 %v1018, 0.5
      %v1027 = vmul.f32 %v1019, 0.5
      %v1028 = vmul.f32 %v1020, 0.5
      %v1029 = vmul.f32 %v1021, 0.5
      %v1030 = vmul.f32 %v1022, 0.5
      %v1031 = vmul.f32 %v1023, 0.5
      %v1032 = vmul.f32 %v1024, 0.5
      %v1033 = vld [vmem:[#allocation3] sm:$0xff]
      %v1034 = vpack.c.bf16 %v1026, %v1025
      %v1035 = vpack.c.bf16 %v1028, %v1027
      %v1036 = vpack.c.bf16 %v1030, %v1029
      %v1037 = vpack.c.bf16 %v1032, %v1031
      %v1039 = vsel %vm879, 1065369472, 0
      %v1042 = vsel %vm879, %v1034, 0
      %v1045 = vsel %vm879, %v1035, 0
      %v1048 = vsel %vm879, %v1036, 0
      %v1051 = vsel %vm879, %v1037, 0
      %1053 = vmatprep.subr.bf16.mxu0 0
      %1054 = vmatpush1.bf16.xpose.msra.mxu0 %v1042
      %1055 = vmatprep.subr.bf16.mxu0 0
      %1056 = vmatpush1.bf16.xpose.msra.mxu0 %v1045
      %1057 = vmatprep.subr.bf16.mxu0 0
      %1058 = vmatpush1.bf16.xpose.msra.mxu0 %v1048
      %1059 = vmatprep.subr.bf16.mxu0 0
      %1060 = vmatpush1.bf16.xpose.msra.mxu0 %v1051
      %1061 = vmatprep.subr.bf16.mxu0 0
      %1062 = vmatpush1.bf16.xpose.msra.mxu0 0
      %1063 = vmatprep.subr.bf16.mxu0 0
      %1064 = vmatpush1.bf16.xpose.msra.mxu0 0
      %1065 = vmatprep.subr.bf16.mxu0 0
      %1066 = vmatpush1.bf16.xpose.msra.mxu0 0
      %1067 = vmatprep.subr.bf16.mxu0 0
      %1068 = vmatpush1.bf16.xpose.msra.mxu0 0
      %1069 = vmatprep.subr.bf16.mxu0 0
      %1070 = vmatpush1.bf16.xpose.msra.mxu0 0
      %1071 = vmatprep.subr.bf16.mxu0 0
      %1072 = vmatpush1.bf16.xpose.msra.mxu0 0
      %1073 = vmatprep.subr.bf16.mxu0 0
      %1074 = vmatpush1.bf16.xpose.msra.mxu0 0
      %1075 = vmatprep.subr.bf16.mxu0 0
      %1076 = vmatpush1.bf16.xpose.msra.mxu0 0
      %1077 = vmatprep.subr.bf16.mxu0 0
      %1078 = vmatpush1.bf16.xpose.msra.mxu0 0
      %1079 = vmatprep.subr.bf16.mxu0 0
      %1080 = vmatpush1.bf16.xpose.msra.mxu0 0
      %1081 = vmatprep.subr.bf16.mxu0 0
      %1082 = vmatpush1.bf16.xpose.msra.mxu0 0
      %1083 = vmatprep.subr.bf16.mxu0 0
      %1084 = vmatpush1.bf16.xpose.msra.mxu0 0
      %1085 = vmatprep.mubr.bf16.mxu0 0
      %1086 = vmatmul.mubr.bf16.gmra.mrb[0].mxu0 %v1039
      %v1087 = vpop.f32.mrb[0].mxu0
      %v1088 = vadd.f32 0.0, %v1087
      %v1089 = vpop.f32.mrb[0].mxu0
      %v1090 = vpop.f32.mrb[0].mxu0
      %v1091 = vpop.f32.mrb[0].mxu0
      %1092 = vdwg.mxu0
      %v1093 = vadd.f32 %v1033, %v1088
      %1094 = vst.msk [vmem:[#allocation3] sm:$0xff] %vm879, %v1093
      // Predicated region
      $region57: #{atomnet_det_forward.2} parent=51 // pred_check
        %p1095 = pneg %p361
      $region58: #{atomnet_det_forward.2} parent=51 // pred_check_branch
        %1097 = sbr.rel (%p1095) target = $region60
      $region59: #{atomnet_det_forward.2} parent=51 // pred_region
        %v1098 = vld [vmem:[#allocation2] sm:$0x1]
        %v1099 = vmul.f32 %v1098, 0.00390625
        %vm1100 = vcmask 253952
        %1101 = vst.msk [vmem:[%s357] sm:$0x1] %vm1100, %v1099
        %v1102 = vld [vmem:[#allocation3] sm:$0x1]
        %v1103 = vmul.f32 %v1102, 0.015625
        %1105 = vrot.lane.b32.xlu0 %v1103, 32
        %v1106 = vpop.permute.xlu0 %1105
        %vm1108 = vcmask 778496
        %1109 = vst.msk [vmem:[%s357] sm:$0x1] %vm1108, %v1106
      $region60: #{atomnet_det_forward.2} parent=51 // pred_fallthru
        _
      %p1110 = scmp.lt.s32.totalorder %s23, 3
      %s1111 = scalar_select %p1110, %s23, 3
      %s1112 = scalar_lea.vmem %s8, %s1111
      // Predicated region
      $region61: #{atomnet_det_forward.2} parent=51 // pred_check
        %p1113 = pneg %p231
      $region62: #{atomnet_det_forward.2} parent=51 // pred_check_branch
        %1115 = sbr.rel (%p1113) target = $region64
      $region63: #{atomnet_det_forward.2} parent=51 // pred_region
        _
      $region64: #{atomnet_det_forward.2} parent=51 // pred_fallthru
        _
    $region52: #{atomnet_det_forward.2} parent=5 // pred_fallthru
      _
    %p1116 = scmp.le.s32.totalorder 2, %s14
    // Predicated region
    $region65: #{atomnet_det_forward.2} parent=5 // pred_check
      %p1117 = pneg %p1116
    $region66: #{atomnet_det_forward.2} parent=5 // pred_check_branch
      %1119 = sbr.rel (%p1117) target = $region68
    $region67: #{atomnet_det_forward.2} parent=5 // pred_region
      %s1120 = ssub.s32 %s14, 2
      // Predicated region
      $region69: #{atomnet_det_forward.2} parent=67 // pred_check
        %p1121 = pneg %p237
      $region70: #{atomnet_det_forward.2} parent=67 // pred_check_branch
        %1123 = sbr.rel (%p1121) target = $region72
      $region71: #{atomnet_det_forward.2} parent=67 // pred_region
        %p1124 = scmp.lt.s32.totalorder %s25, 3
        %s1125 = scalar_select %p1124, %s25, 3
        %s1126 = scalar_lea.vmem %s8, %s1125
      $region72: #{atomnet_det_forward.2} parent=67 // pred_fallthru
        _
    $region68: #{atomnet_det_forward.2} parent=5 // pred_fallthru
      _
  $region6: #{atomnet_det_forward.2} parent=0 // loop_footer
    %s18 = sadd.s32 1, %s14
  $region7: #{atomnet_det_forward.2} parent=0 // loop_footer_branch
    %13 = sbr.rel target = $region3
  $region8: #{atomnet_det_forward.2} parent=0 // loop_exit
    _

// kernel: atomnet_det_forward.3
$region0: #{atomnet_det_forward.3}
  #allocation0 [shape = 'u32[]', space=smem, size = 0x4, offset = 0x4, fixed_abs, tag = 'smem constant byte address 0x4 - core index']
  #allocation1 [shape = 'u32[144,128]{1,0:T(1,128)}', space=vmem, size = 0x12000, scoped, tag = 'internal scratch']
  %s0 = inlined_call_operand.vmem [shape: f32[2,96], index: 0, kind: input, shape index: {}]
  %s1 = inlined_call_operand.vmem [shape: f32[2,96], index: 1, kind: input, shape index: {}]
  %s2 = inlined_call_operand.vmem [shape: f32[2,4], index: 2, kind: input, shape index: {}]
  %s3 = inlined_call_operand.vmem [shape: f32[2,8,4], index: 3, kind: input, shape index: {}]
  %s4 = inlined_call_operand.vmem [shape: f32[96,32], index: 4, kind: input, shape index: {}]
  %s5 = inlined_call_operand.vmem [shape: f32[1,32], index: 5, kind: input, shape index: {}]
  %s6 = inlined_call_operand.vmem [shape: f32[96,32], index: 6, kind: input, shape index: {}]
  %s7 = inlined_call_operand.vmem [shape: f32[1,32], index: 7, kind: input, shape index: {}]
  %s8 = inlined_call_operand.vmem [shape: f32[4,32], index: 8, kind: input, shape index: {}]
  %s9 = inlined_call_operand.vmem [shape: f32[1,32], index: 9, kind: input, shape index: {}]
  %s10 = inlined_call_operand.vmem [shape: f32[4,32], index: 10, kind: input, shape index: {}]
  %s11 = inlined_call_operand.vmem [shape: f32[1,32], index: 11, kind: input, shape index: {}]
  %s12 = inlined_call_operand.hbm [shape: f32[2,8], index: 12, kind: output, shape index: {}]
  %s13 = sld [smem:[#allocation0]]
  $region58: #{atomnet_det_forward.3} parent=0
    _
  %s15 = ssub.s32 1, %s13
  %s16 = scalar_select 0, %s15, %s13
  $region1: #{atomnet_det_forward.3} parent=0
    #allocation2 [shape = 'u8[1024]{0}', space=vmem, size = 0x400, scoped, tag = 'output window, operand 0, single buffered']
    #allocation3 [shape = 's32[1]{0}', space=sflag, size = 0x4, scoped, tag = 'scoped memory for atomnet_det_forward.3']
    %17 = vsyncpa [#allocation3], 0
    // Predicated region
    $region2: #{atomnet_det_forward.3} parent=1 // pred_check
      _
    $region3: #{atomnet_det_forward.3} parent=1 // pred_check_branch
      %19 = sbr.rel (0) target = $region5
    $region4: #{atomnet_det_forward.3} parent=1 // pred_region
      _
    $region5: #{atomnet_det_forward.3} parent=1 // pred_fallthru
      _
    // Predicated region
    $region6: #{atomnet_det_forward.3} parent=1 // pred_check
      _
    $region7: #{atomnet_det_forward.3} parent=1 // pred_check_branch
      %21 = sbr.rel (0) target = $region9
    $region8: #{atomnet_det_forward.3} parent=1 // pred_region
      _
    $region9: #{atomnet_det_forward.3} parent=1 // pred_fallthru
      _
    // Predicated region
    $region10: #{atomnet_det_forward.3} parent=1 // pred_check
      _
    $region11: #{atomnet_det_forward.3} parent=1 // pred_check_branch
      %23 = sbr.rel (0) target = $region13
    $region12: #{atomnet_det_forward.3} parent=1 // pred_region
      _
    $region13: #{atomnet_det_forward.3} parent=1 // pred_fallthru
      _
    // Predicated region
    $region14: #{atomnet_det_forward.3} parent=1 // pred_check
      _
    $region15: #{atomnet_det_forward.3} parent=1 // pred_check_branch
      %25 = sbr.rel (0) target = $region17
    $region16: #{atomnet_det_forward.3} parent=1 // pred_region
      _
    $region17: #{atomnet_det_forward.3} parent=1 // pred_fallthru
      _
    // Predicated region
    $region18: #{atomnet_det_forward.3} parent=1 // pred_check
      _
    $region19: #{atomnet_det_forward.3} parent=1 // pred_check_branch
      %27 = sbr.rel (0) target = $region21
    $region20: #{atomnet_det_forward.3} parent=1 // pred_region
      _
    $region21: #{atomnet_det_forward.3} parent=1 // pred_fallthru
      _
    // Predicated region
    $region22: #{atomnet_det_forward.3} parent=1 // pred_check
      _
    $region23: #{atomnet_det_forward.3} parent=1 // pred_check_branch
      %29 = sbr.rel (0) target = $region25
    $region24: #{atomnet_det_forward.3} parent=1 // pred_region
      _
    $region25: #{atomnet_det_forward.3} parent=1 // pred_fallthru
      _
    // Predicated region
    $region26: #{atomnet_det_forward.3} parent=1 // pred_check
      _
    $region27: #{atomnet_det_forward.3} parent=1 // pred_check_branch
      %31 = sbr.rel (0) target = $region29
    $region28: #{atomnet_det_forward.3} parent=1 // pred_region
      _
    $region29: #{atomnet_det_forward.3} parent=1 // pred_fallthru
      _
    // Predicated region
    $region30: #{atomnet_det_forward.3} parent=1 // pred_check
      _
    $region31: #{atomnet_det_forward.3} parent=1 // pred_check_branch
      %33 = sbr.rel (0) target = $region33
    $region32: #{atomnet_det_forward.3} parent=1 // pred_region
      _
    $region33: #{atomnet_det_forward.3} parent=1 // pred_fallthru
      _
    // Predicated region
    $region34: #{atomnet_det_forward.3} parent=1 // pred_check
      _
    $region35: #{atomnet_det_forward.3} parent=1 // pred_check_branch
      %35 = sbr.rel (0) target = $region37
    $region36: #{atomnet_det_forward.3} parent=1 // pred_region
      _
    $region37: #{atomnet_det_forward.3} parent=1 // pred_fallthru
      _
    // Predicated region
    $region38: #{atomnet_det_forward.3} parent=1 // pred_check
      _
    $region39: #{atomnet_det_forward.3} parent=1 // pred_check_branch
      %37 = sbr.rel (0) target = $region41
    $region40: #{atomnet_det_forward.3} parent=1 // pred_region
      _
    $region41: #{atomnet_det_forward.3} parent=1 // pred_fallthru
      _
    // Predicated region
    $region42: #{atomnet_det_forward.3} parent=1 // pred_check
      _
    $region43: #{atomnet_det_forward.3} parent=1 // pred_check_branch
      %39 = sbr.rel (0) target = $region45
    $region44: #{atomnet_det_forward.3} parent=1 // pred_region
      _
    $region45: #{atomnet_det_forward.3} parent=1 // pred_fallthru
      _
    // Predicated region
    $region46: #{atomnet_det_forward.3} parent=1 // pred_check
      _
    $region47: #{atomnet_det_forward.3} parent=1 // pred_check_branch
      %41 = sbr.rel (0) target = $region49
    $region48: #{atomnet_det_forward.3} parent=1 // pred_region
      _
    $region49: #{atomnet_det_forward.3} parent=1 // pred_fallthru
      _
    %v43 = vld [vmem:[%s0] sm:$0x3]
    %v44 = vld [vmem:[%s2] sm:$0x3]
    %v45 = vld [vmem:[%s9] sm:$0x1]
    %v46 = vld [vmem:[%s8] sm:$0x1]
    %48 = vset.pattern.permute.xlu0 0
    %49 = vperm.xlu0 %48, %v44
    %v50 = vpop.permute.xlu0 %49
    %v52 = vlaneseq
    %v53 = vshrl.u32 %v52, 7
    %v54 = vsub.s32 0, %v53
    %v55 = vrot.slane %v46, %v54
    %v56 = vmul.f32 %v50, %v55
    %v58 = vlaneseq
    %v59 = vshrl.u32 %v58, 7
    %v60 = vsub.s32 0, %v59
    %v61 = vrot.slane %v45, %v60
    %v63 = vadd.f32 %v61, %v56
    %v64 = vld [vmem:[%s8 + $0x1] sm:$0x1]
    %65 = vset.pattern.permute.xlu0 1
    %66 = vperm.xlu0 %65, %v44
    %v67 = vpop.permute.xlu0 %66
    %v69 = vlaneseq
    %v70 = vshrl.u32 %v69, 7
    %v71 = vsub.s32 0, %v70
    %v72 = vrot.slane %v64, %v71
    %v73 = vmul.f32 %v67, %v72
    %v74 = vadd.f32 %v63, %v73
    %v75 = vld [vmem:[%s8 + $0x2] sm:$0x1]
    %76 = vset.pattern.permute.xlu0 2
    %77 = vperm.xlu0 %76, %v44
    %v78 = vpop.permute.xlu0 %77
    %v80 = vlaneseq
    %v81 = vshrl.u32 %v80, 7
    %v82 = vsub.s32 0, %v81
    %v83 = vrot.slane %v75, %v82
    %v84 = vmul.f32 %v78, %v83
    %v85 = vadd.f32 %v74, %v84
    %v86 = vld [vmem:[%s8 + $0x3] sm:$0x1]
    %87 = vset.pattern.permute.xlu0 3
    %88 = vperm.xlu0 %87, %v44
    %v89 = vpop.permute.xlu0 %88
    %v91 = vlaneseq
    %v92 = vshrl.u32 %v91, 7
    %v93 = vsub.s32 0, %v92
    %v94 = vrot.slane %v86, %v93
    %v95 = vmul.f32 %v89, %v94
    %v96 = vadd.f32 %v85, %v95
    %v97 = vpack.c.bf16 %v43, %v43
    %v98 = vld [vmem:[%s4] sm:$0xff]
    %v99 = vld [vmem:[%s4 + $0x8] sm:$0xff]
    %v100 = vld [vmem:[%s4 + $0x10] sm:$0xff]
    %v101 = vld [vmem:[%s4 + $0x18] sm:$0xff]
    %v102 = vld [vmem:[%s4 + $0x20] sm:$0xff]
    %v103 = vld [vmem:[%s4 + $0x28] sm:$0xff]
    %v104 = vld [vmem:[%s4 + $0x30] sm:$0xff]
    %v105 = vld [vmem:[%s4 + $0x38] sm:$0xff]
    %v106 = vld [vmem:[%s4 + $0x40] sm:$0xff]
    %v107 = vld [vmem:[%s4 + $0x48] sm:$0xff]
    %v108 = vld [vmem:[%s4 + $0x50] sm:$0xff]
    %v109 = vld [vmem:[%s4 + $0x58] sm:$0xff]
    %v110 = vpack.c.bf16 %v99, %v98
    %v111 = vpack.c.bf16 %v101, %v100
    %v112 = vpack.c.bf16 %v103, %v102
    %v113 = vpack.c.bf16 %v105, %v104
    %v114 = vpack.c.bf16 %v107, %v106
    %v115 = vpack.c.bf16 %v109, %v108
    %v116 = vld [vmem:[%s5] sm:$0x1]
    %v118 = vlaneseq
    %v119 = vshrl.u32 %v118, 7
    %v120 = vsub.s32 0, %v119
    %v121 = vrot.slane %v116, %v120
    %vm123 = vcmask 785408
    %v125 = vsel %vm123, %v97, 0
    %127 = vmatprep.subr.bf16.mxu0 0
    %128 = vmatpush1.bf16.msra.mxu0 %v110
    %129 = vmatprep.subr.bf16.mxu0 0
    %130 = vmatpush1.bf16.msra.mxu0 %v111
    %131 = vmatprep.subr.bf16.mxu0 0
    %132 = vmatpush1.bf16.msra.mxu0 %v112
    %133 = vmatprep.subr.bf16.mxu0 0
    %134 = vmatpush1.bf16.msra.mxu0 %v113
    %135 = vmatprep.subr.bf16.mxu0 0
    %136 = vmatpush1.bf16.msra.mxu0 %v114
    %137 = vmatprep.subr.bf16.mxu0 0
    %138 = vmatpush1.bf16.msra.mxu0 %v115
    %139 = vmatprep.subr.bf16.mxu0 0
    %140 = vmatpush1.bf16.msra.mxu0 0
    %141 = vmatprep.subr.bf16.mxu0 0
    %142 = vmatpush1.bf16.msra.mxu0 0
    %143 = vmatprep.subr.bf16.mxu0 0
    %144 = vmatpush1.bf16.msra.mxu0 0
    %145 = vmatprep.subr.bf16.mxu0 0
    %146 = vmatpush1.bf16.msra.mxu0 0
    %147 = vmatprep.subr.bf16.mxu0 0
    %148 = vmatpush1.bf16.msra.mxu0 0
    %149 = vmatprep.subr.bf16.mxu0 0
    %150 = vmatpush1.bf16.msra.mxu0 0
    %151 = vmatprep.subr.bf16.mxu0 0
    %152 = vmatpush1.bf16.msra.mxu0 0
    %153 = vmatprep.subr.bf16.mxu0 0
    %154 = vmatpush1.bf16.msra.mxu0 0
    %155 = vmatprep.subr.bf16.mxu0 0
    %156 = vmatpush1.bf16.msra.mxu0 0
    %157 = vmatprep.subr.bf16.mxu0 0
    %158 = vmatpush1.bf16.msra.mxu0 0
    %159 = vmatprep.mubr.bf16.mxu0 0
    %160 = vmatmul.mubr.bf16.gmra.mrb[0].mxu0 %v125
    %v161 = vpop.f32.mrb[0].mxu0
    %v162 = vadd.f32 %v121, %v161
    %v163 = vpop.f32.mrb[0].mxu0
    %v164 = vpop.f32.mrb[0].mxu0
    %v165 = vpop.f32.mrb[0].mxu0
    %166 = vdwg.mxu0
    %v167 = vmax.f32 %v162, 0.0
    %v168 = vadd.f32 %v167, %v96
    %v169 = vld [vmem:[%s1] sm:$0x3]
    %v170 = vpack.c.bf16 %v169, %v169
    %v171 = vld [vmem:[%s6] sm:$0xff]
    %v172 = vld [vmem:[%s6 + $0x8] sm:$0xff]
    %v173 = vld [vmem:[%s6 + $0x10] sm:$0xff]
    %v174 = vld [vmem:[%s6 + $0x18] sm:$0xff]
    %v175 = vld [vmem:[%s6 + $0x20] sm:$0xff]
    %v176 = vld [vmem:[%s6 + $0x28] sm:$0xff]
    %v177 = vld [vmem:[%s6 + $0x30] sm:$0xff]
    %v178 = vld [vmem:[%s6 + $0x38] sm:$0xff]
    %v179 = vld [vmem:[%s6 + $0x40] sm:$0xff]
    %v180 = vld [vmem:[%s6 + $0x48] sm:$0xff]
    %v181 = vld [vmem:[%s6 + $0x50] sm:$0xff]
    %v182 = vld [vmem:[%s6 + $0x58] sm:$0xff]
    %v183 = vpack.c.bf16 %v172, %v171
    %v184 = vpack.c.bf16 %v174, %v173
    %v185 = vpack.c.bf16 %v176, %v175
    %v186 = vpack.c.bf16 %v178, %v177
    %v187 = vpack.c.bf16 %v180, %v179
    %v188 = vpack.c.bf16 %v182, %v181
    %v189 = vld [vmem:[%s7] sm:$0x1]
    %v191 = vlaneseq
    %v192 = vshrl.u32 %v191, 7
    %v193 = vsub.s32 0, %v192
    %v194 = vrot.slane %v189, %v193
    %v197 = vsel %vm123, %v170, 0
    %199 = vmatprep.subr.bf16.mxu0 0
    %200 = vmatpush1.bf16.msra.mxu0 %v183
    %201 = vmatprep.subr.bf16.mxu0 0
    %202 = vmatpush1.bf16.msra.mxu0 %v184
    %203 = vmatprep.subr.bf16.mxu0 0
    %204 = vmatpush1.bf16.msra.mxu0 %v185
    %205 = vmatprep.subr.bf16.mxu0 0
    %206 = vmatpush1.bf16.msra.mxu0 %v186
    %207 = vmatprep.subr.bf16.mxu0 0
    %208 = vmatpush1.bf16.msra.mxu0 %v187
    %209 = vmatprep.subr.bf16.mxu0 0
    %210 = vmatpush1.bf16.msra.mxu0 %v188
    %211 = vmatprep.subr.bf16.mxu0 0
    %212 = vmatpush1.bf16.msra.mxu0 0
    %213 = vmatprep.subr.bf16.mxu0 0
    %214 = vmatpush1.bf16.msra.mxu0 0
    %215 = vmatprep.subr.bf16.mxu0 0
    %216 = vmatpush1.bf16.msra.mxu0 0
    %217 = vmatprep.subr.bf16.mxu0 0
    %218 = vmatpush1.bf16.msra.mxu0 0
    %219 = vmatprep.subr.bf16.mxu0 0
    %220 = vmatpush1.bf16.msra.mxu0 0
    %221 = vmatprep.subr.bf16.mxu0 0
    %222 = vmatpush1.bf16.msra.mxu0 0
    %223 = vmatprep.subr.bf16.mxu0 0
    %224 = vmatpush1.bf16.msra.mxu0 0
    %225 = vmatprep.subr.bf16.mxu0 0
    %226 = vmatpush1.bf16.msra.mxu0 0
    %227 = vmatprep.subr.bf16.mxu0 0
    %228 = vmatpush1.bf16.msra.mxu0 0
    %229 = vmatprep.subr.bf16.mxu0 0
    %230 = vmatpush1.bf16.msra.mxu0 0
    %231 = vmatprep.mubr.bf16.mxu0 0
    %232 = vmatmul.mubr.bf16.gmra.mrb[0].mxu0 %v197
    %v233 = vpop.f32.mrb[0].mxu0
    %v234 = vadd.f32 %v194, %v233
    %v235 = vpop.f32.mrb[0].mxu0
    %v236 = vpop.f32.mrb[0].mxu0
    %v237 = vpop.f32.mrb[0].mxu0
    %238 = vdwg.mxu0
    %v239 = vmax.f32 %v234, 0.0
    %v240 = vmul.f32 %v168, %v239
    %v241 = vld [vmem:[%s3] sm:$0xff]
    %v242 = vld [vmem:[%s3 + $0x8] sm:$0xff]
    %v243 = vld [vmem:[%s11] sm:$0x1]
    %v244 = vld [vmem:[%s10] sm:$0x1]
    %246 = vset.pattern.permute.xlu0 0
    %247 = vperm.xlu0 %246, %v241
    %v248 = vpop.permute.xlu0 %247
    %251 = vset.pattern.permute.xlu0 0
    %252 = vperm.xlu0 %251, %v242
    %v253 = vpop.permute.xlu0 %252
    %v255 = vlaneseq
    %v256 = vshrl.u32 %v255, 7
    %v257 = vsub.s32 0, %v256
    %v258 = vrot.slane %v244, %v257
    %v259 = vmul.f32 %v248, %v258
    %v260 = vmul.f32 %v253, %v258
    %v262 = vlaneseq
    %v263 = vshrl.u32 %v262, 7
    %v264 = vsub.s32 0, %v263
    %v265 = vrot.slane %v243, %v264
    %v267 = vadd.f32 %v265, %v259
    %v268 = vadd.f32 %v265, %v260
    %v269 = vld [vmem:[%s10 + $0x1] sm:$0x1]
    %270 = vset.pattern.permute.xlu0 1
    %271 = vperm.xlu0 %270, %v241
    %v272 = vpop.permute.xlu0 %271
    %274 = vset.pattern.permute.xlu0 1
    %275 = vperm.xlu0 %274, %v242
    %v276 = vpop.permute.xlu0 %275
    %v278 = vlaneseq
    %v279 = vshrl.u32 %v278, 7
    %v280 = vsub.s32 0, %v279
    %v281 = vrot.slane %v269, %v280
    %v282 = vmul.f32 %v272, %v281
    %v283 = vmul.f32 %v276, %v281
    %v284 = vadd.f32 %v267, %v282
    %v285 = vadd.f32 %v268, %v283
    %v286 = vld [vmem:[%s10 + $0x2] sm:$0x1]
    %287 = vset.pattern.permute.xlu0 2
    %288 = vperm.xlu0 %287, %v241
    %v289 = vpop.permute.xlu0 %288
    %291 = vset.pattern.permute.xlu0 2
    %292 = vperm.xlu0 %291, %v242
    %v293 = vpop.permute.xlu0 %292
    %v295 = vlaneseq
    %v296 = vshrl.u32 %v295, 7
    %v297 = vsub.s32 0, %v296
    %v298 = vrot.slane %v286, %v297
    %v299 = vmul.f32 %v289, %v298
    %v300 = vmul.f32 %v293, %v298
    %v301 = vadd.f32 %v284, %v299
    %v302 = vadd.f32 %v285, %v300
    %v303 = vld [vmem:[%s10 + $0x3] sm:$0x1]
    %304 = vset.pattern.permute.xlu0 3
    %305 = vperm.xlu0 %304, %v241
    %v306 = vpop.permute.xlu0 %305
    %308 = vset.pattern.permute.xlu0 3
    %309 = vperm.xlu0 %308, %v242
    %v310 = vpop.permute.xlu0 %309
    %v312 = vlaneseq
    %v313 = vshrl.u32 %v312, 7
    %v314 = vsub.s32 0, %v313
    %v315 = vrot.slane %v303, %v314
    %v316 = vmul.f32 %v306, %v315
    %v317 = vmul.f32 %v310, %v315
    %v318 = vadd.f32 %v301, %v316
    %v319 = vadd.f32 %v302, %v317
    %v322 = vunpack.c.l.s4 1966171168
    %v323 = vunpack.c.0.s8 %v322
    %v324 = vlaneseq
    %v325 = vshrl.u32 %v324, 7
    %v326 = vsub.s32 %v323, %v325
    %v327 = vrot.slane %v240, %v326
    %v328 = vcombine.high %v327, %v327
    %v330 = vunpack.c.l.s4 1966171168
    %v331 = vunpack.c.0.s8 %v330
    %v332 = vlaneseq
    %v333 = vshrl.u32 %v332, 7
    %v334 = vsub.s32 %v331, %v333
    %v335 = vrot.slane %v327, %v334
    %v337 = vunpack.c.l.s4 1966171168
    %v338 = vunpack.c.0.s8 %v337
    %v339 = vlaneseq
    %v340 = vshrl.u32 %v339, 7
    %v341 = vsub.s32 %v338, %v340
    %v342 = vrot.slane %v328, %v341
    %v343 = vlaneseq
    %v344 = vshrl.u32 %v343, 7
    %v345 = vsub.s32 0, %v344
    %v346 = vrot.slane %v335, %v345
    %v347 = vlaneseq
    %v348 = vshrl.u32 %v347, 7
    %v349 = vsub.s32 0, %v348
    %v350 = vrot.slane %v342, %v349
    %v353 = vmul.f32 %v346, %v318
    %v354 = vmul.f32 %v350, %v319
    %vm355 = vcmask 261120
    %v356 = vsel %vm355, %v353, 0.0
    %357 = vadd.xlane.f32.xlu0 %v356
    %v358 = vpop.xlane.xlu0 %357
    %v359 = vsel %vm355, %v354, 0.0
    %360 = vadd.xlane.f32.xlu0 %v359
    %v361 = vpop.xlane.xlu0 %360
    %v364 = vlaneseq
    %v365 = vand.u32 %v364, 127
    %v366 = vlaneseq
    %v367 = vshrl.u32 %v366, 7
    %v368 = vsub.s32 %v365, %v367
    %v369 = vrot.slane %v358, %v368
    %v370 = vlaneseq
    %v371 = vshrl.u32 %v370, 7
    %v372 = vsub.s32 %v365, %v371
    %v373 = vrot.slane %v361, %v372
    %vm374 = vcmask 1041409
    %v375 = vsel %vm374, %v373, %v369
    %vm377 = vcmask 58368
    %378 = vst.msk [vmem:[#allocation2] sm:$0x3] %vm377, %v375
    // Predicated region
    $region50: #{atomnet_det_forward.3} parent=1 // pred_check
      _
    $region51: #{atomnet_det_forward.3} parent=1 // pred_check_branch
      %380 = sbr.rel (0) target = $region53
    $region52: #{atomnet_det_forward.3} parent=1 // pred_region
      %s382 = ssub.s32 32, 32
      %383 = vsyncadd [#allocation3], %s382
      %s385 = sshll.u32 [#allocation2], 4
      %s386 = int_to_ptr.vmem [resolvable:$true] %s385
      %388 = dma.vmem_to_hbm [thread:$0]  %s386, 32, %s12, [#allocation3]
    $region53: #{atomnet_det_forward.3} parent=1 // pred_fallthru
      _
    // Predicated region
    $region54: #{atomnet_det_forward.3} parent=1 // pred_check
      _
    $region55: #{atomnet_det_forward.3} parent=1 // pred_check_branch
      %390 = sbr.rel (0) target = $region57
    $region56: #{atomnet_det_forward.3} parent=1 // pred_region
      %391 = dma.done [#allocation3], 32
    $region57: #{atomnet_det_forward.3} parent=1 // pred_fallthru
      _
    %392 = vsyncpa [#allocation3], 1

</llo_original>
